<compile_context>
chip_gen: v7x
topology: tpu7x:2x2x1
jax: 0.10.0
libtpu: 0.0.40
codegen_flags: <defaults>
</compile_context>

<pallas_src>
import functools
import operator

import jax
import jax.numpy as jnp
from jax.experimental import pallas as pl
from jax.experimental.pallas import tpu as pltpu


def _pick_matmul_dtype():
    """bf16 MXU operands on v6e/v7x (full-rate MXU, cheap casts); f32 elsewhere
    (v5e has no bf16 VPU and its MXU is not the binding unit here)."""
    try:
        kind = jax.devices()[0].device_kind.lower()
    except Exception:
        return jnp.float32
    if any(tag in kind for tag in ("v6", "v7", "7x")):
        return jnp.bfloat16
    return jnp.float32


_MATMUL_DTYPE = _pick_matmul_dtype()


# ----------------------------- Pallas kernel --------------------------------

def _residual_group_kernel(x_ref, w1_ref, b1_ref, w2_ref, b2_ref, mask_ref, o_ref,
                           *, n_blocks, res_branches, shifts, matmul_dtype):
    """Whole ResidualGroup forward for one image (one grid step), fully fused.

    x_ref   : (1, C, M)              image activations, M = H*W on the lane axis
    w1_ref  : (n_blocks, R*C, T*C)   per-block unit1 weights, all R branches'
                                     output channels stacked (BN scale folded in)
    b1_ref  : (n_blocks, R*C, 1)     per-block stacked unit1 folded BN bias
    w2_ref  : (n_blocks, R, C, T*C)  per-block/branch unit2 weights (BN folded in)
    b2_ref  : (n_blocks, R, C, 1)    per-block/branch unit2 folded BN bias
    mask_ref: (T, 1, M)              0/1 validity mask per conv tap (border padding)
    o_ref   : (1, C, M)              group output for this image
    """
    c = x_ref.shape[1]
    t_taps = len(shifts)

    # Hoist the (1, M) tap masks out of all build loops (loaded once, reused).
    masks = [mask_ref[t] for t in range(t_taps)]

    def build_columns(h):
        # ReLU -> rolled + masked taps -> (T*C, M) column matrix kept in vregs.
        # No VMEM scratch round-trip (review: the col stores were saturating the
        # single vector-store slot on v5e).  Zero-padded border positions are
        # forced to zero by the masks, equivalent to ReLU-before-pad.
        a = jnp.maximum(h, 0.0)
        parts = []
        for t in range(t_taps):
            s = shifts[t]
            if s == 0:
                parts.append(a)              # center tap: always valid, no roll/mask
            else:
                # tap value at flat position m is a[m + oy*W + ox] when valid
                # (jnp.roll semantics: out[i] = in[i - shift], shift = -(oy*W+ox)).
                parts.append(pltpu.roll(a, shift=s, axis=1) * masks[t])
        # f32 concat keeps 8-sublane-aligned pieces; cast once for the MXU
        # (no-op when matmul_dtype is float32).
        return jnp.concatenate(parts, axis=0).astype(matmul_dtype)

    x = x_ref[0]
    for blk in range(n_blocks):
        block_in = x
        # unit1 im2col is shared by every branch (all consume ReLU(block_in));
        # one branch-stacked matmul yields every branch's unit1 activations.
        col1 = build_columns(block_in)
        h1_all = jnp.dot(w1_ref[blk], col1,
                         preferred_element_type=jnp.float32) + b1_ref[blk]
        branch_sum = None
        for r in range(res_branches):
            h1 = h1_all[r * c:(r + 1) * c, :]
            col2 = build_columns(h1)
            h2 = jnp.dot(w2_ref[blk, r], col2,
                         preferred_element_type=jnp.float32) + b2_ref[blk, r]
            branch_sum = h2 if branch_sum is None else branch_sum + h2
        x = branch_sum + block_in            # identity residual skip
    o_ref[0] = x


# ------------------------- host-side kernel helpers --------------------------

def _build_tap_shifts_and_masks(filter_size, padding, h, w):
    """Static lane-roll shifts and 0/1 border masks for a stride-1 'same' conv,
    for a single image (m = H*W lanes)."""
    m = h * w
    mm = jnp.arange(m, dtype=jnp.int32)
    ys = mm // w
    xs = mm % w
    shifts, masks = [], []
    for dy in range(filter_size):
        for dx in range(filter_size):
            oy, ox = dy - padding, dx - padding
            shifts.append(int((-(oy * w + ox)) % m))
            valid = ((ys + oy >= 0) & (ys + oy < h) &
                     (xs + ox >= 0) & (xs + ox < w))
            masks.append(valid.astype(jnp.float32))
    masks = jnp.stack(masks, axis=0).reshape(filter_size * filter_size, 1, m)
    return tuple(shifts), masks


def _fold_unit_weight(unit):
    """(Cout, Cin, KH, KW) conv weight * BN scale -> (Cout, KH*KW*Cin) tap-major,
    matching the kernel's im2col row order (tap t = dy*KW + dx, channel inner)."""
    w = unit["w"]
    cout, cin, kh, kw = w.shape
    w = w * unit["scale"].reshape(cout, 1, 1, 1)
    return jnp.transpose(w, (0, 2, 3, 1)).reshape(cout, kh * kw * cin)


def _pack_group_params(params, matmul_dtype):
    """Pack per-block stacked unit1 weights/biases and per-branch unit2 weights/biases."""
    w1_b, b1_b, w2_b, b2_b = [], [], [], []
    for blk in params:
        w1_rows, b1_rows, w2_rs, b2_rs = [], [], [], []
        for br in blk["branches"]:
            w1_rows.append(_fold_unit_weight(br["unit1"]))
            b1_rows.append(br["unit1"]["bias"].reshape(-1, 1))
            w2_rs.append(_fold_unit_weight(br["unit2"]))
            b2_rs.append(br["unit2"]["bias"].reshape(-1, 1))
        w1_b.append(jnp.concatenate(w1_rows, axis=0))      # (R*C, T*C)
        b1_b.append(jnp.concatenate(b1_rows, axis=0))      # (R*C, 1)
        w2_b.append(jnp.stack(w2_rs, axis=0))               # (R, C, T*C)
        b2_b.append(jnp.stack(b2_rs, axis=0))               # (R, C, 1)
    w1 = jnp.stack(w1_b, axis=0).astype(matmul_dtype)
    b1 = jnp.stack(b1_b, axis=0)
    w2 = jnp.stack(w2_b, axis=0).astype(matmul_dtype)
    b2 = jnp.stack(b2_b, axis=0)
    return w1, b1, w2, b2


@jax.jit
def residual_group_forward(x_nchw, params):
    """x_nchw: (N, C, H, W) f32 (PyTorch layout).  Whole group in one pallas_call.
    Only free reshapes surround the call (no HBM transpose passes)."""
    n, c, hh, ww = x_nchw.shape
    n_blocks = len(params)
    res_branches = len(params[0]["branches"])
    w0 = params[0]["branches"][0]["unit1"]["w"]
    filter_size = w0.shape[2]
    padding = round(filter_size / 3)          # same padding rule as the reference
    assert 2 * padding == filter_size - 1, "fused kernel assumes 'same' spatial conv"
    assert w0.shape[0] == w0.shape[1] == c, \
        "fused kernel assumes n_input_plane == n_output_plane (identity skip)"
    hw = hh * ww
    t_taps = filter_size * filter_size

    shifts, masks = _build_tap_shifts_and_masks(filter_size, padding, hh, ww)
    w1, b1, w2, b2 = _pack_group_params(params, _MATMUL_DTYPE)

    # Channels on sublanes, H*W on lanes: a free view of the contiguous NCHW input.
    x3d = x_nchw.reshape(n, c, hw)

    kernel = functools.partial(
        _residual_group_kernel, n_blocks=n_blocks, res_branches=res_branches,
        shifts=shifts, matmul_dtype=_MATMUL_DTYPE)

    out3d = pl.pallas_call(
        kernel,
        out_shape=jax.ShapeDtypeStruct((n, c, hw), jnp.float32),
        grid_spec=pltpu.PrefetchScalarGridSpec(
            num_scalar_prefetch=0,
            grid=(n,),                        # one image per step (2nd TC on v7x);
            in_specs=[                        # weights/masks: constant index maps
                pl.BlockSpec((1, c, hw), lambda i: (i, 0, 0)),
                pl.BlockSpec((n_blocks, res_branches * c, t_taps * c),
                             lambda i: (0, 0, 0)),
                pl.BlockSpec((n_blocks, res_branches * c, 1), lambda i: (0, 0, 0)),
                pl.BlockSpec((n_blocks, res_branches, c, t_taps * c),
                             lambda i: (0, 0, 0, 0)),
                pl.BlockSpec((n_blocks, res_branches, c, 1), lambda i: (0, 0, 0, 0)),
                pl.BlockSpec((t_taps, 1, hw), lambda i: (0, 0, 0)),
            ],
            out_specs=pl.BlockSpec((1, c, hw), lambda i: (i, 0, 0)),
        ),
        compiler_params=pltpu.CompilerParams(
            dimension_semantics=("parallel",)),
    )(x3d, w1, b1, w2, b2, masks)
    return out3d.reshape(n, c, hh, ww)


# --------------------------- parameter creation ------------------------------

def _fold_bn(gamma, beta, mean, var, eps=1e-5):
    scale = gamma / jnp.sqrt(var + eps)
    bias = beta - mean * scale
    return scale, bias


def init_unit_params(key, cin, cout, ksize):
    kw_, kg, kb, km, kv = jax.random.split(key, 5)
    # PyTorch Conv2d weight layout (Cout, Cin, KH, KW), kept as-is.
    w_oihw = 0.1 * jax.random.normal(kw_, (cout, cin, ksize, ksize), jnp.float32)
    gamma = 1.0 + 0.1 * jax.random.normal(kg, (cout,), jnp.float32)
    beta = 0.1 * jax.random.normal(kb, (cout,), jnp.float32)
    mean = 0.1 * jax.random.normal(km, (cout,), jnp.float32)
    var = jnp.abs(jax.random.normal(kv, (cout,), jnp.float32)) + 0.5
    scale, bias = _fold_bn(gamma, beta, mean, var)
    return {"w": w_oihw, "scale": scale, "bias": bias}


def init_basic_block_params(key, cin, cout, ksize, res_branches):
    branches = []
    for bk in jax.random.split(key, res_branches):
        k1, k2 = jax.random.split(bk)
        branches.append({
            "unit1": init_unit_params(k1, cin, cout, ksize),
            "unit2": init_unit_params(k2, cout, cout, ksize),
        })
    return {"branches": branches}


def init_residual_group_params(key, n_input_plane, n_output_plane, n_blocks,
                               filter_size, res_branches):
    # TODO(synk): projection SkipConnection (avg-pool + dual 1x1 conv concat + BN)
    # for n_input_plane != n_output_plane; ResidualGroup uses stride=1 and this demo
    # uses equal planes, so the skip path is identity.
    keys = jax.random.split(key, n_blocks)
    blocks = [init_basic_block_params(keys[0], n_input_plane, n_output_plane,
                                      filter_size, res_branches)]
    for i in range(1, n_blocks):
        blocks.append(init_basic_block_params(keys[i], n_output_plane, n_output_plane,
                                              filter_size, res_branches))
    return blocks


# --------------------------- pure-JAX reference -------------------------------

def _relu_conv_bn_ref(x, w_oihw, scale, bias, padding):
    y = jnp.maximum(x, 0.0)
    y = jax.lax.conv_general_dilated(
        y, w_oihw, window_strides=(1, 1),
        padding=[(padding, padding), (padding, padding)],
        dimension_numbers=("NCHW", "OIHW", "NCHW"),
        precision=jax.lax.Precision.HIGHEST)
    return y * scale.reshape(1, -1, 1, 1) + bias.reshape(1, -1, 1, 1)


def residual_group_forward_ref(x, params, filter_size):
    padding = round(filter_size / 3)
    for blk in params:
        branch_outs = []
        for br in blk["branches"]:
            h = _relu_conv_bn_ref(x, br["unit1"]["w"], br["unit1"]["scale"],
                                  br["unit1"]["bias"], padding)
            h = _relu_conv_bn_ref(h, br["unit2"]["w"], br["unit2"]["scale"],
                                  br["unit2"]["bias"], padding)
            branch_outs.append(h)
        x = functools.reduce(operator.add, branch_outs) + x
    return x


# ----------------------------------- main -------------------------------------

if __name__ == "__main__":
    key = jax.random.PRNGKey(0)
    kx, kp = jax.random.split(key)

    # ResidualGroup(block=BasicBlock, n_input_plane=8, n_output_plane=8,
    #               n_blocks=2, filter_size=3, res_branches=2, stride=1)
    n_input_plane = 8
    n_output_plane = 8
    n_blocks = 2
    filter_size = 3
    res_branches = 2

    batch, height, width = 2, 16, 16
    x_nchw = jax.random.normal(kx, (batch, n_input_plane, height, width), jnp.float32)

    params = init_residual_group_params(kp, n_input_plane, n_output_plane,
                                        n_blocks, filter_size, res_branches)

    out_nchw = residual_group_forward(x_nchw, params)
    jax.block_until_ready(out_nchw)

    ref_nchw = residual_group_forward_ref(x_nchw, params, filter_size)

    # bf16 MXU operands (v6e/v7x path) keep f32 accumulation; loosen tolerance there.
    tol = 2e-3 if _MATMUL_DTYPE == jnp.float32 else 2e-2

    assert out_nchw.shape == (batch, n_output_plane, height, width)
    assert bool(jnp.all(jnp.isfinite(out_nchw)))
    assert bool(jnp.allclose(out_nchw, ref_nchw, rtol=tol, atol=tol)), \
        "mismatch vs JAX reference"

    print("KERNEL_OK")
</pallas_src>

<mosaic_0001>
module attributes {stable_mosaic.version = 11 : i64} {
  func.func @_residual_group_kernel(%arg0: i32, %arg1: memref<1x8x256xf32, #tpu.memory_space<vmem>>, %arg2: memref<2x16x72xf32, #tpu.memory_space<vmem>>, %arg3: memref<2x16x1xf32, #tpu.memory_space<vmem>>, %arg4: memref<2x2x8x72xf32, #tpu.memory_space<vmem>>, %arg5: memref<2x2x8x1xf32, #tpu.memory_space<vmem>>, %arg6: memref<9x1x256xf32, #tpu.memory_space<vmem>>, %arg7: memref<1x8x256xf32, #tpu.memory_space<vmem>>) attributes {dimension_semantics = [#tpu.dimension_semantics<parallel>], iteration_bounds = array<i64: 2>, scalar_prefetch = 0 : i64, scratch_operands = 0 : i64, tpu.core_type = #tpu.core_type<tc>, window_params = [{transform_indices = @transform_0, window_bounds = array<i64: 1, 8, 256>}, {pipeline_mode = #tpu.pipeline_mode<synchronous>, transform_indices = @transform_1, window_bounds = array<i64: 2, 16, 72>}, {pipeline_mode = #tpu.pipeline_mode<synchronous>, transform_indices = @transform_2, window_bounds = array<i64: 2, 16, 1>}, {pipeline_mode = #tpu.pipeline_mode<synchronous>, transform_indices = @transform_3, window_bounds = array<i64: 2, 2, 8, 72>}, {pipeline_mode = #tpu.pipeline_mode<synchronous>, transform_indices = @transform_4, window_bounds = array<i64: 2, 2, 8, 1>}, {pipeline_mode = #tpu.pipeline_mode<synchronous>, transform_indices = @transform_5, window_bounds = array<i64: 9, 1, 256>}, {transform_indices = @transform_6, window_bounds = array<i64: 1, 8, 256>}]} {
    %c0 = arith.constant 0 : index
    %c0_0 = arith.constant 0 : index
    %c0_1 = arith.constant 0 : index
    %0 = vector.load %arg6[%c0, %c0_0, %c0_1] : memref<9x1x256xf32, #tpu.memory_space<vmem>>, vector<1x1x256xf32>
    %1 = vector.shape_cast %0 : vector<1x1x256xf32> to vector<1x256xf32>
    %c1 = arith.constant 1 : index
    %c0_2 = arith.constant 0 : index
    %c0_3 = arith.constant 0 : index
    %2 = vector.load %arg6[%c1, %c0_2, %c0_3] : memref<9x1x256xf32, #tpu.memory_space<vmem>>, vector<1x1x256xf32>
    %3 = vector.shape_cast %2 : vector<1x1x256xf32> to vector<1x256xf32>
    %c2 = arith.constant 2 : index
    %c0_4 = arith.constant 0 : index
    %c0_5 = arith.constant 0 : index
    %4 = vector.load %arg6[%c2, %c0_4, %c0_5] : memref<9x1x256xf32, #tpu.memory_space<vmem>>, vector<1x1x256xf32>
    %5 = vector.shape_cast %4 : vector<1x1x256xf32> to vector<1x256xf32>
    %c3 = arith.constant 3 : index
    %c0_6 = arith.constant 0 : index
    %c0_7 = arith.constant 0 : index
    %6 = vector.load %arg6[%c3, %c0_6, %c0_7] : memref<9x1x256xf32, #tpu.memory_space<vmem>>, vector<1x1x256xf32>
    %7 = vector.shape_cast %6 : vector<1x1x256xf32> to vector<1x256xf32>
    %c5 = arith.constant 5 : index
    %c0_8 = arith.constant 0 : index
    %c0_9 = arith.constant 0 : index
    %8 = vector.load %arg6[%c5, %c0_8, %c0_9] : memref<9x1x256xf32, #tpu.memory_space<vmem>>, vector<1x1x256xf32>
    %9 = vector.shape_cast %8 : vector<1x1x256xf32> to vector<1x256xf32>
    %c6 = arith.constant 6 : index
    %c0_10 = arith.constant 0 : index
    %c0_11 = arith.constant 0 : index
    %10 = vector.load %arg6[%c6, %c0_10, %c0_11] : memref<9x1x256xf32, #tpu.memory_space<vmem>>, vector<1x1x256xf32>
    %11 = vector.shape_cast %10 : vector<1x1x256xf32> to vector<1x256xf32>
    %c7 = arith.constant 7 : index
    %c0_12 = arith.constant 0 : index
    %c0_13 = arith.constant 0 : index
    %12 = vector.load %arg6[%c7, %c0_12, %c0_13] : memref<9x1x256xf32, #tpu.memory_space<vmem>>, vector<1x1x256xf32>
    %13 = vector.shape_cast %12 : vector<1x1x256xf32> to vector<1x256xf32>
    %c8 = arith.constant 8 : index
    %c0_14 = arith.constant 0 : index
    %c0_15 = arith.constant 0 : index
    %14 = vector.load %arg6[%c8, %c0_14, %c0_15] : memref<9x1x256xf32, #tpu.memory_space<vmem>>, vector<1x1x256xf32>
    %15 = vector.shape_cast %14 : vector<1x1x256xf32> to vector<1x256xf32>
    %c0_16 = arith.constant 0 : index
    %c0_17 = arith.constant 0 : index
    %c0_18 = arith.constant 0 : index
    %16 = vector.load %arg1[%c0_16, %c0_17, %c0_18] : memref<1x8x256xf32, #tpu.memory_space<vmem>>, vector<1x8x256xf32>
    %17 = vector.shape_cast %16 : vector<1x8x256xf32> to vector<8x256xf32>
    %cst = arith.constant 0.000000e+00 : f32
    %18 = vector.broadcast %cst : f32 to vector<8x256xf32>
    %19 = arith.maximumf %17, %18 : vector<8x256xf32>
    %c17_i32 = arith.constant 17 : i32
    %20 = tpu.dynamic_rotate %19 by %c17_i32 dim 1 : vector<8x256xf32>, i32 -> vector<8x256xf32>
    %21 = vector.broadcast %1 : vector<1x256xf32> to vector<8x256xf32>
    %22 = arith.mulf %20, %21 : vector<8x256xf32>
    %c16_i32 = arith.constant 16 : i32
    %23 = tpu.dynamic_rotate %19 by %c16_i32 dim 1 : vector<8x256xf32>, i32 -> vector<8x256xf32>
    %24 = vector.broadcast %3 : vector<1x256xf32> to vector<8x256xf32>
    %25 = arith.mulf %23, %24 : vector<8x256xf32>
    %c15_i32 = arith.constant 15 : i32
    %26 = tpu.dynamic_rotate %19 by %c15_i32 dim 1 : vector<8x256xf32>, i32 -> vector<8x256xf32>
    %27 = vector.broadcast %5 : vector<1x256xf32> to vector<8x256xf32>
    %28 = arith.mulf %26, %27 : vector<8x256xf32>
    %c1_i32 = arith.constant 1 : i32
    %29 = tpu.dynamic_rotate %19 by %c1_i32 dim 1 : vector<8x256xf32>, i32 -> vector<8x256xf32>
    %30 = vector.broadcast %7 : vector<1x256xf32> to vector<8x256xf32>
    %31 = arith.mulf %29, %30 : vector<8x256xf32>
    %c255_i32 = arith.constant 255 : i32
    %32 = tpu.dynamic_rotate %19 by %c255_i32 dim 1 : vector<8x256xf32>, i32 -> vector<8x256xf32>
    %33 = vector.broadcast %9 : vector<1x256xf32> to vector<8x256xf32>
    %34 = arith.mulf %32, %33 : vector<8x256xf32>
    %c241_i32 = arith.constant 241 : i32
    %35 = tpu.dynamic_rotate %19 by %c241_i32 dim 1 : vector<8x256xf32>, i32 -> vector<8x256xf32>
    %36 = vector.broadcast %11 : vector<1x256xf32> to vector<8x256xf32>
    %37 = arith.mulf %35, %36 : vector<8x256xf32>
    %c240_i32 = arith.constant 240 : i32
    %38 = tpu.dynamic_rotate %19 by %c240_i32 dim 1 : vector<8x256xf32>, i32 -> vector<8x256xf32>
    %39 = vector.broadcast %13 : vector<1x256xf32> to vector<8x256xf32>
    %40 = arith.mulf %38, %39 : vector<8x256xf32>
    %c239_i32 = arith.constant 239 : i32
    %41 = tpu.dynamic_rotate %19 by %c239_i32 dim 1 : vector<8x256xf32>, i32 -> vector<8x256xf32>
    %42 = vector.broadcast %15 : vector<1x256xf32> to vector<8x256xf32>
    %43 = arith.mulf %41, %42 : vector<8x256xf32>
    %44 = tpu.concatenate %22, %25, %28, %31, %19, %34, %37, %40, %43 in 0 : vector<8x256xf32>, vector<8x256xf32>, vector<8x256xf32>, vector<8x256xf32>, vector<8x256xf32>, vector<8x256xf32>, vector<8x256xf32>, vector<8x256xf32>, vector<8x256xf32> -> vector<72x256xf32>
    %c0_19 = arith.constant 0 : index
    %c0_20 = arith.constant 0 : index
    %c0_21 = arith.constant 0 : index
    %45 = vector.load %arg2[%c0_19, %c0_20, %c0_21] : memref<2x16x72xf32, #tpu.memory_space<vmem>>, vector<1x16x72xf32>
    %46 = vector.shape_cast %45 : vector<1x16x72xf32> to vector<16x72xf32>
    %cst_22 = arith.constant dense<0.000000e+00> : vector<16x256xf32>
    %47 = tpu.matmul %46, %44, %cst_22 {dimension_numbers = #tpu.dot_dimension_numbers<[1], [0], [0], [1], [0, 0, 1, 1], [], []>} : vector<16x72xf32>, vector<72x256xf32>, vector<16x256xf32> -> vector<16x256xf32>
    %c0_23 = arith.constant 0 : index
    %c0_24 = arith.constant 0 : index
    %c0_25 = arith.constant 0 : index
    %48 = vector.load %arg3[%c0_23, %c0_24, %c0_25] : memref<2x16x1xf32, #tpu.memory_space<vmem>>, vector<1x16x1xf32>
    %49 = vector.shape_cast %48 : vector<1x16x1xf32> to vector<16x1xf32>
    %50 = vector.broadcast %49 : vector<16x1xf32> to vector<16x256xf32>
    %51 = arith.addf %47, %50 : vector<16x256xf32>
    %52 = vector.extract_strided_slice %51 {offsets = [0, 0], sizes = [8, 256], strides = [1, 1]} : vector<16x256xf32> to vector<8x256xf32>
    %cst_26 = arith.constant 0.000000e+00 : f32
    %53 = vector.broadcast %cst_26 : f32 to vector<8x256xf32>
    %54 = arith.maximumf %52, %53 : vector<8x256xf32>
    %c17_i32_27 = arith.constant 17 : i32
    %55 = tpu.dynamic_rotate %54 by %c17_i32_27 dim 1 : vector<8x256xf32>, i32 -> vector<8x256xf32>
    %56 = vector.broadcast %1 : vector<1x256xf32> to vector<8x256xf32>
    %57 = arith.mulf %55, %56 : vector<8x256xf32>
    %c16_i32_28 = arith.constant 16 : i32
    %58 = tpu.dynamic_rotate %54 by %c16_i32_28 dim 1 : vector<8x256xf32>, i32 -> vector<8x256xf32>
    %59 = vector.broadcast %3 : vector<1x256xf32> to vector<8x256xf32>
    %60 = arith.mulf %58, %59 : vector<8x256xf32>
    %c15_i32_29 = arith.constant 15 : i32
    %61 = tpu.dynamic_rotate %54 by %c15_i32_29 dim 1 : vector<8x256xf32>, i32 -> vector<8x256xf32>
    %62 = vector.broadcast %5 : vector<1x256xf32> to vector<8x256xf32>
    %63 = arith.mulf %61, %62 : vector<8x256xf32>
    %c1_i32_30 = arith.constant 1 : i32
    %64 = tpu.dynamic_rotate %54 by %c1_i32_30 dim 1 : vector<8x256xf32>, i32 -> vector<8x256xf32>
    %65 = vector.broadcast %7 : vector<1x256xf32> to vector<8x256xf32>
    %66 = arith.mulf %64, %65 : vector<8x256xf32>
    %c255_i32_31 = arith.constant 255 : i32
    %67 = tpu.dynamic_rotate %54 by %c255_i32_31 dim 1 : vector<8x256xf32>, i32 -> vector<8x256xf32>
    %68 = vector.broadcast %9 : vector<1x256xf32> to vector<8x256xf32>
    %69 = arith.mulf %67, %68 : vector<8x256xf32>
    %c241_i32_32 = arith.constant 241 : i32
    %70 = tpu.dynamic_rotate %54 by %c241_i32_32 dim 1 : vector<8x256xf32>, i32 -> vector<8x256xf32>
    %71 = vector.broadcast %11 : vector<1x256xf32> to vector<8x256xf32>
    %72 = arith.mulf %70, %71 : vector<8x256xf32>
    %c240_i32_33 = arith.constant 240 : i32
    %73 = tpu.dynamic_rotate %54 by %c240_i32_33 dim 1 : vector<8x256xf32>, i32 -> vector<8x256xf32>
    %74 = vector.broadcast %13 : vector<1x256xf32> to vector<8x256xf32>
    %75 = arith.mulf %73, %74 : vector<8x256xf32>
    %c239_i32_34 = arith.constant 239 : i32
    %76 = tpu.dynamic_rotate %54 by %c239_i32_34 dim 1 : vector<8x256xf32>, i32 -> vector<8x256xf32>
    %77 = vector.broadcast %15 : vector<1x256xf32> to vector<8x256xf32>
    %78 = arith.mulf %76, %77 : vector<8x256xf32>
    %79 = tpu.concatenate %57, %60, %63, %66, %54, %69, %72, %75, %78 in 0 : vector<8x256xf32>, vector<8x256xf32>, vector<8x256xf32>, vector<8x256xf32>, vector<8x256xf32>, vector<8x256xf32>, vector<8x256xf32>, vector<8x256xf32>, vector<8x256xf32> -> vector<72x256xf32>
    %c0_35 = arith.constant 0 : index
    %c0_36 = arith.constant 0 : index
    %c0_37 = arith.constant 0 : index
    %c0_38 = arith.constant 0 : index
    %80 = vector.load %arg4[%c0_35, %c0_36, %c0_37, %c0_38] : memref<2x2x8x72xf32, #tpu.memory_space<vmem>>, vector<1x1x8x72xf32>
    %81 = vector.shape_cast %80 : vector<1x1x8x72xf32> to vector<8x72xf32>
    %cst_39 = arith.constant dense<0.000000e+00> : vector<8x256xf32>
    %82 = tpu.matmul %81, %79, %cst_39 {dimension_numbers = #tpu.dot_dimension_numbers<[1], [0], [0], [1], [0, 0, 1, 1], [], []>} : vector<8x72xf32>, vector<72x256xf32>, vector<8x256xf32> -> vector<8x256xf32>
    %c0_40 = arith.constant 0 : index
    %c0_41 = arith.constant 0 : index
    %c0_42 = arith.constant 0 : index
    %c0_43 = arith.constant 0 : index
    %83 = vector.load %arg5[%c0_40, %c0_41, %c0_42, %c0_43] : memref<2x2x8x1xf32, #tpu.memory_space<vmem>>, vector<1x1x8x1xf32>
    %84 = vector.shape_cast %83 : vector<1x1x8x1xf32> to vector<8x1xf32>
    %85 = vector.broadcast %84 : vector<8x1xf32> to vector<8x256xf32>
    %86 = arith.addf %82, %85 : vector<8x256xf32>
    %87 = vector.extract_strided_slice %51 {offsets = [8, 0], sizes = [8, 256], strides = [1, 1]} : vector<16x256xf32> to vector<8x256xf32>
    %cst_44 = arith.constant 0.000000e+00 : f32
    %88 = vector.broadcast %cst_44 : f32 to vector<8x256xf32>
    %89 = arith.maximumf %87, %88 : vector<8x256xf32>
    %c17_i32_45 = arith.constant 17 : i32
    %90 = tpu.dynamic_rotate %89 by %c17_i32_45 dim 1 : vector<8x256xf32>, i32 -> vector<8x256xf32>
    %91 = vector.broadcast %1 : vector<1x256xf32> to vector<8x256xf32>
    %92 = arith.mulf %90, %91 : vector<8x256xf32>
    %c16_i32_46 = arith.constant 16 : i32
    %93 = tpu.dynamic_rotate %89 by %c16_i32_46 dim 1 : vector<8x256xf32>, i32 -> vector<8x256xf32>
    %94 = vector.broadcast %3 : vector<1x256xf32> to vector<8x256xf32>
    %95 = arith.mulf %93, %94 : vector<8x256xf32>
    %c15_i32_47 = arith.constant 15 : i32
    %96 = tpu.dynamic_rotate %89 by %c15_i32_47 dim 1 : vector<8x256xf32>, i32 -> vector<8x256xf32>
    %97 = vector.broadcast %5 : vector<1x256xf32> to vector<8x256xf32>
    %98 = arith.mulf %96, %97 : vector<8x256xf32>
    %c1_i32_48 = arith.constant 1 : i32
    %99 = tpu.dynamic_rotate %89 by %c1_i32_48 dim 1 : vector<8x256xf32>, i32 -> vector<8x256xf32>
    %100 = vector.broadcast %7 : vector<1x256xf32> to vector<8x256xf32>
    %101 = arith.mulf %99, %100 : vector<8x256xf32>
    %c255_i32_49 = arith.constant 255 : i32
    %102 = tpu.dynamic_rotate %89 by %c255_i32_49 dim 1 : vector<8x256xf32>, i32 -> vector<8x256xf32>
    %103 = vector.broadcast %9 : vector<1x256xf32> to vector<8x256xf32>
    %104 = arith.mulf %102, %103 : vector<8x256xf32>
    %c241_i32_50 = arith.constant 241 : i32
    %105 = tpu.dynamic_rotate %89 by %c241_i32_50 dim 1 : vector<8x256xf32>, i32 -> vector<8x256xf32>
    %106 = vector.broadcast %11 : vector<1x256xf32> to vector<8x256xf32>
    %107 = arith.mulf %105, %106 : vector<8x256xf32>
    %c240_i32_51 = arith.constant 240 : i32
    %108 = tpu.dynamic_rotate %89 by %c240_i32_51 dim 1 : vector<8x256xf32>, i32 -> vector<8x256xf32>
    %109 = vector.broadcast %13 : vector<1x256xf32> to vector<8x256xf32>
    %110 = arith.mulf %108, %109 : vector<8x256xf32>
    %c239_i32_52 = arith.constant 239 : i32
    %111 = tpu.dynamic_rotate %89 by %c239_i32_52 dim 1 : vector<8x256xf32>, i32 -> vector<8x256xf32>
    %112 = vector.broadcast %15 : vector<1x256xf32> to vector<8x256xf32>
    %113 = arith.mulf %111, %112 : vector<8x256xf32>
    %114 = tpu.concatenate %92, %95, %98, %101, %89, %104, %107, %110, %113 in 0 : vector<8x256xf32>, vector<8x256xf32>, vector<8x256xf32>, vector<8x256xf32>, vector<8x256xf32>, vector<8x256xf32>, vector<8x256xf32>, vector<8x256xf32>, vector<8x256xf32> -> vector<72x256xf32>
    %c0_53 = arith.constant 0 : index
    %c1_54 = arith.constant 1 : index
    %c0_55 = arith.constant 0 : index
    %c0_56 = arith.constant 0 : index
    %115 = vector.load %arg4[%c0_53, %c1_54, %c0_55, %c0_56] : memref<2x2x8x72xf32, #tpu.memory_space<vmem>>, vector<1x1x8x72xf32>
    %116 = vector.shape_cast %115 : vector<1x1x8x72xf32> to vector<8x72xf32>
    %cst_57 = arith.constant dense<0.000000e+00> : vector<8x256xf32>
    %117 = tpu.matmul %116, %114, %cst_57 {dimension_numbers = #tpu.dot_dimension_numbers<[1], [0], [0], [1], [0, 0, 1, 1], [], []>} : vector<8x72xf32>, vector<72x256xf32>, vector<8x256xf32> -> vector<8x256xf32>
    %c0_58 = arith.constant 0 : index
    %c1_59 = arith.constant 1 : index
    %c0_60 = arith.constant 0 : index
    %c0_61 = arith.constant 0 : index
    %118 = vector.load %arg5[%c0_58, %c1_59, %c0_60, %c0_61] : memref<2x2x8x1xf32, #tpu.memory_space<vmem>>, vector<1x1x8x1xf32>
    %119 = vector.shape_cast %118 : vector<1x1x8x1xf32> to vector<8x1xf32>
    %120 = vector.broadcast %119 : vector<8x1xf32> to vector<8x256xf32>
    %121 = arith.addf %117, %120 : vector<8x256xf32>
    %122 = arith.addf %86, %121 : vector<8x256xf32>
    %123 = arith.addf %122, %17 : vector<8x256xf32>
    %cst_62 = arith.constant 0.000000e+00 : f32
    %124 = vector.broadcast %cst_62 : f32 to vector<8x256xf32>
    %125 = arith.maximumf %123, %124 : vector<8x256xf32>
    %c17_i32_63 = arith.constant 17 : i32
    %126 = tpu.dynamic_rotate %125 by %c17_i32_63 dim 1 : vector<8x256xf32>, i32 -> vector<8x256xf32>
    %127 = vector.broadcast %1 : vector<1x256xf32> to vector<8x256xf32>
    %128 = arith.mulf %126, %127 : vector<8x256xf32>
    %c16_i32_64 = arith.constant 16 : i32
    %129 = tpu.dynamic_rotate %125 by %c16_i32_64 dim 1 : vector<8x256xf32>, i32 -> vector<8x256xf32>
    %130 = vector.broadcast %3 : vector<1x256xf32> to vector<8x256xf32>
    %131 = arith.mulf %129, %130 : vector<8x256xf32>
    %c15_i32_65 = arith.constant 15 : i32
    %132 = tpu.dynamic_rotate %125 by %c15_i32_65 dim 1 : vector<8x256xf32>, i32 -> vector<8x256xf32>
    %133 = vector.broadcast %5 : vector<1x256xf32> to vector<8x256xf32>
    %134 = arith.mulf %132, %133 : vector<8x256xf32>
    %c1_i32_66 = arith.constant 1 : i32
    %135 = tpu.dynamic_rotate %125 by %c1_i32_66 dim 1 : vector<8x256xf32>, i32 -> vector<8x256xf32>
    %136 = vector.broadcast %7 : vector<1x256xf32> to vector<8x256xf32>
    %137 = arith.mulf %135, %136 : vector<8x256xf32>
    %c255_i32_67 = arith.constant 255 : i32
    %138 = tpu.dynamic_rotate %125 by %c255_i32_67 dim 1 : vector<8x256xf32>, i32 -> vector<8x256xf32>
    %139 = vector.broadcast %9 : vector<1x256xf32> to vector<8x256xf32>
    %140 = arith.mulf %138, %139 : vector<8x256xf32>
    %c241_i32_68 = arith.constant 241 : i32
    %141 = tpu.dynamic_rotate %125 by %c241_i32_68 dim 1 : vector<8x256xf32>, i32 -> vector<8x256xf32>
    %142 = vector.broadcast %11 : vector<1x256xf32> to vector<8x256xf32>
    %143 = arith.mulf %141, %142 : vector<8x256xf32>
    %c240_i32_69 = arith.constant 240 : i32
    %144 = tpu.dynamic_rotate %125 by %c240_i32_69 dim 1 : vector<8x256xf32>, i32 -> vector<8x256xf32>
    %145 = vector.broadcast %13 : vector<1x256xf32> to vector<8x256xf32>
    %146 = arith.mulf %144, %145 : vector<8x256xf32>
    %c239_i32_70 = arith.constant 239 : i32
    %147 = tpu.dynamic_rotate %125 by %c239_i32_70 dim 1 : vector<8x256xf32>, i32 -> vector<8x256xf32>
    %148 = vector.broadcast %15 : vector<1x256xf32> to vector<8x256xf32>
    %149 = arith.mulf %147, %148 : vector<8x256xf32>
    %150 = tpu.concatenate %128, %131, %134, %137, %125, %140, %143, %146, %149 in 0 : vector<8x256xf32>, vector<8x256xf32>, vector<8x256xf32>, vector<8x256xf32>, vector<8x256xf32>, vector<8x256xf32>, vector<8x256xf32>, vector<8x256xf32>, vector<8x256xf32> -> vector<72x256xf32>
    %c1_71 = arith.constant 1 : index
    %c0_72 = arith.constant 0 : index
    %c0_73 = arith.constant 0 : index
    %151 = vector.load %arg2[%c1_71, %c0_72, %c0_73] : memref<2x16x72xf32, #tpu.memory_space<vmem>>, vector<1x16x72xf32>
    %152 = vector.shape_cast %151 : vector<1x16x72xf32> to vector<16x72xf32>
    %cst_74 = arith.constant dense<0.000000e+00> : vector<16x256xf32>
    %153 = tpu.matmul %152, %150, %cst_74 {dimension_numbers = #tpu.dot_dimension_numbers<[1], [0], [0], [1], [0, 0, 1, 1], [], []>} : vector<16x72xf32>, vector<72x256xf32>, vector<16x256xf32> -> vector<16x256xf32>
    %c1_75 = arith.constant 1 : index
    %c0_76 = arith.constant 0 : index
    %c0_77 = arith.constant 0 : index
    %154 = vector.load %arg3[%c1_75, %c0_76, %c0_77] : memref<2x16x1xf32, #tpu.memory_space<vmem>>, vector<1x16x1xf32>
    %155 = vector.shape_cast %154 : vector<1x16x1xf32> to vector<16x1xf32>
    %156 = vector.broadcast %155 : vector<16x1xf32> to vector<16x256xf32>
    %157 = arith.addf %153, %156 : vector<16x256xf32>
    %158 = vector.extract_strided_slice %157 {offsets = [0, 0], sizes = [8, 256], strides = [1, 1]} : vector<16x256xf32> to vector<8x256xf32>
    %cst_78 = arith.constant 0.000000e+00 : f32
    %159 = vector.broadcast %cst_78 : f32 to vector<8x256xf32>
    %160 = arith.maximumf %158, %159 : vector<8x256xf32>
    %c17_i32_79 = arith.constant 17 : i32
    %161 = tpu.dynamic_rotate %160 by %c17_i32_79 dim 1 : vector<8x256xf32>, i32 -> vector<8x256xf32>
    %162 = vector.broadcast %1 : vector<1x256xf32> to vector<8x256xf32>
    %163 = arith.mulf %161, %162 : vector<8x256xf32>
    %c16_i32_80 = arith.constant 16 : i32
    %164 = tpu.dynamic_rotate %160 by %c16_i32_80 dim 1 : vector<8x256xf32>, i32 -> vector<8x256xf32>
    %165 = vector.broadcast %3 : vector<1x256xf32> to vector<8x256xf32>
    %166 = arith.mulf %164, %165 : vector<8x256xf32>
    %c15_i32_81 = arith.constant 15 : i32
    %167 = tpu.dynamic_rotate %160 by %c15_i32_81 dim 1 : vector<8x256xf32>, i32 -> vector<8x256xf32>
    %168 = vector.broadcast %5 : vector<1x256xf32> to vector<8x256xf32>
    %169 = arith.mulf %167, %168 : vector<8x256xf32>
    %c1_i32_82 = arith.constant 1 : i32
    %170 = tpu.dynamic_rotate %160 by %c1_i32_82 dim 1 : vector<8x256xf32>, i32 -> vector<8x256xf32>
    %171 = vector.broadcast %7 : vector<1x256xf32> to vector<8x256xf32>
    %172 = arith.mulf %170, %171 : vector<8x256xf32>
    %c255_i32_83 = arith.constant 255 : i32
    %173 = tpu.dynamic_rotate %160 by %c255_i32_83 dim 1 : vector<8x256xf32>, i32 -> vector<8x256xf32>
    %174 = vector.broadcast %9 : vector<1x256xf32> to vector<8x256xf32>
    %175 = arith.mulf %173, %174 : vector<8x256xf32>
    %c241_i32_84 = arith.constant 241 : i32
    %176 = tpu.dynamic_rotate %160 by %c241_i32_84 dim 1 : vector<8x256xf32>, i32 -> vector<8x256xf32>
    %177 = vector.broadcast %11 : vector<1x256xf32> to vector<8x256xf32>
    %178 = arith.mulf %176, %177 : vector<8x256xf32>
    %c240_i32_85 = arith.constant 240 : i32
    %179 = tpu.dynamic_rotate %160 by %c240_i32_85 dim 1 : vector<8x256xf32>, i32 -> vector<8x256xf32>
    %180 = vector.broadcast %13 : vector<1x256xf32> to vector<8x256xf32>
    %181 = arith.mulf %179, %180 : vector<8x256xf32>
    %c239_i32_86 = arith.constant 239 : i32
    %182 = tpu.dynamic_rotate %160 by %c239_i32_86 dim 1 : vector<8x256xf32>, i32 -> vector<8x256xf32>
    %183 = vector.broadcast %15 : vector<1x256xf32> to vector<8x256xf32>
    %184 = arith.mulf %182, %183 : vector<8x256xf32>
    %185 = tpu.concatenate %163, %166, %169, %172, %160, %175, %178, %181, %184 in 0 : vector<8x256xf32>, vector<8x256xf32>, vector<8x256xf32>, vector<8x256xf32>, vector<8x256xf32>, vector<8x256xf32>, vector<8x256xf32>, vector<8x256xf32>, vector<8x256xf32> -> vector<72x256xf32>
    %c1_87 = arith.constant 1 : index
    %c0_88 = arith.constant 0 : index
    %c0_89 = arith.constant 0 : index
    %c0_90 = arith.constant 0 : index
    %186 = vector.load %arg4[%c1_87, %c0_88, %c0_89, %c0_90] : memref<2x2x8x72xf32, #tpu.memory_space<vmem>>, vector<1x1x8x72xf32>
    %187 = vector.shape_cast %186 : vector<1x1x8x72xf32> to vector<8x72xf32>
    %cst_91 = arith.constant dense<0.000000e+00> : vector<8x256xf32>
    %188 = tpu.matmul %187, %185, %cst_91 {dimension_numbers = #tpu.dot_dimension_numbers<[1], [0], [0], [1], [0, 0, 1, 1], [], []>} : vector<8x72xf32>, vector<72x256xf32>, vector<8x256xf32> -> vector<8x256xf32>
    %c1_92 = arith.constant 1 : index
    %c0_93 = arith.constant 0 : index
    %c0_94 = arith.constant 0 : index
    %c0_95 = arith.constant 0 : index
    %189 = vector.load %arg5[%c1_92, %c0_93, %c0_94, %c0_95] : memref<2x2x8x1xf32, #tpu.memory_space<vmem>>, vector<1x1x8x1xf32>
    %190 = vector.shape_cast %189 : vector<1x1x8x1xf32> to vector<8x1xf32>
    %191 = vector.broadcast %190 : vector<8x1xf32> to vector<8x256xf32>
    %192 = arith.addf %188, %191 : vector<8x256xf32>
    %193 = vector.extract_strided_slice %157 {offsets = [8, 0], sizes = [8, 256], strides = [1, 1]} : vector<16x256xf32> to vector<8x256xf32>
    %cst_96 = arith.constant 0.000000e+00 : f32
    %194 = vector.broadcast %cst_96 : f32 to vector<8x256xf32>
    %195 = arith.maximumf %193, %194 : vector<8x256xf32>
    %c17_i32_97 = arith.constant 17 : i32
    %196 = tpu.dynamic_rotate %195 by %c17_i32_97 dim 1 : vector<8x256xf32>, i32 -> vector<8x256xf32>
    %197 = vector.broadcast %1 : vector<1x256xf32> to vector<8x256xf32>
    %198 = arith.mulf %196, %197 : vector<8x256xf32>
    %c16_i32_98 = arith.constant 16 : i32
    %199 = tpu.dynamic_rotate %195 by %c16_i32_98 dim 1 : vector<8x256xf32>, i32 -> vector<8x256xf32>
    %200 = vector.broadcast %3 : vector<1x256xf32> to vector<8x256xf32>
    %201 = arith.mulf %199, %200 : vector<8x256xf32>
    %c15_i32_99 = arith.constant 15 : i32
    %202 = tpu.dynamic_rotate %195 by %c15_i32_99 dim 1 : vector<8x256xf32>, i32 -> vector<8x256xf32>
    %203 = vector.broadcast %5 : vector<1x256xf32> to vector<8x256xf32>
    %204 = arith.mulf %202, %203 : vector<8x256xf32>
    %c1_i32_100 = arith.constant 1 : i32
    %205 = tpu.dynamic_rotate %195 by %c1_i32_100 dim 1 : vector<8x256xf32>, i32 -> vector<8x256xf32>
    %206 = vector.broadcast %7 : vector<1x256xf32> to vector<8x256xf32>
    %207 = arith.mulf %205, %206 : vector<8x256xf32>
    %c255_i32_101 = arith.constant 255 : i32
    %208 = tpu.dynamic_rotate %195 by %c255_i32_101 dim 1 : vector<8x256xf32>, i32 -> vector<8x256xf32>
    %209 = vector.broadcast %9 : vector<1x256xf32> to vector<8x256xf32>
    %210 = arith.mulf %208, %209 : vector<8x256xf32>
    %c241_i32_102 = arith.constant 241 : i32
    %211 = tpu.dynamic_rotate %195 by %c241_i32_102 dim 1 : vector<8x256xf32>, i32 -> vector<8x256xf32>
    %212 = vector.broadcast %11 : vector<1x256xf32> to vector<8x256xf32>
    %213 = arith.mulf %211, %212 : vector<8x256xf32>
    %c240_i32_103 = arith.constant 240 : i32
    %214 = tpu.dynamic_rotate %195 by %c240_i32_103 dim 1 : vector<8x256xf32>, i32 -> vector<8x256xf32>
    %215 = vector.broadcast %13 : vector<1x256xf32> to vector<8x256xf32>
    %216 = arith.mulf %214, %215 : vector<8x256xf32>
    %c239_i32_104 = arith.constant 239 : i32
    %217 = tpu.dynamic_rotate %195 by %c239_i32_104 dim 1 : vector<8x256xf32>, i32 -> vector<8x256xf32>
    %218 = vector.broadcast %15 : vector<1x256xf32> to vector<8x256xf32>
    %219 = arith.mulf %217, %218 : vector<8x256xf32>
    %220 = tpu.concatenate %198, %201, %204, %207, %195, %210, %213, %216, %219 in 0 : vector<8x256xf32>, vector<8x256xf32>, vector<8x256xf32>, vector<8x256xf32>, vector<8x256xf32>, vector<8x256xf32>, vector<8x256xf32>, vector<8x256xf32>, vector<8x256xf32> -> vector<72x256xf32>
    %c1_105 = arith.constant 1 : index
    %c1_106 = arith.constant 1 : index
    %c0_107 = arith.constant 0 : index
    %c0_108 = arith.constant 0 : index
    %221 = vector.load %arg4[%c1_105, %c1_106, %c0_107, %c0_108] : memref<2x2x8x72xf32, #tpu.memory_space<vmem>>, vector<1x1x8x72xf32>
    %222 = vector.shape_cast %221 : vector<1x1x8x72xf32> to vector<8x72xf32>
    %cst_109 = arith.constant dense<0.000000e+00> : vector<8x256xf32>
    %223 = tpu.matmul %222, %220, %cst_109 {dimension_numbers = #tpu.dot_dimension_numbers<[1], [0], [0], [1], [0, 0, 1, 1], [], []>} : vector<8x72xf32>, vector<72x256xf32>, vector<8x256xf32> -> vector<8x256xf32>
    %c1_110 = arith.constant 1 : index
    %c1_111 = arith.constant 1 : index
    %c0_112 = arith.constant 0 : index
    %c0_113 = arith.constant 0 : index
    %224 = vector.load %arg5[%c1_110, %c1_111, %c0_112, %c0_113] : memref<2x2x8x1xf32, #tpu.memory_space<vmem>>, vector<1x1x8x1xf32>
    %225 = vector.shape_cast %224 : vector<1x1x8x1xf32> to vector<8x1xf32>
    %226 = vector.broadcast %225 : vector<8x1xf32> to vector<8x256xf32>
    %227 = arith.addf %223, %226 : vector<8x256xf32>
    %228 = arith.addf %192, %227 : vector<8x256xf32>
    %229 = arith.addf %228, %123 : vector<8x256xf32>
    %c0_114 = arith.constant 0 : index
    %c0_115 = arith.constant 0 : index
    %c0_116 = arith.constant 0 : index
    %230 = vector.load %arg7[%c0_114, %c0_115, %c0_116] : memref<1x8x256xf32, #tpu.memory_space<vmem>>, vector<1x8x256xf32>
    %231 = vector.shape_cast %230 : vector<1x8x256xf32> to vector<8x256xf32>
    %232 = vector.shape_cast %229 : vector<8x256xf32> to vector<1x8x256xf32>
    tpu.vector_store %arg7[%c0_114, %c0_115, %c0_116], %232 {strides = array<i32>} : memref<1x8x256xf32, #tpu.memory_space<vmem>>, vector<1x8x256xf32>,
    return
  }
  func.func @transform_0(%arg0: i32) -> (i32, i32, i32) {
    %c0_i32 = arith.constant 0 : i32
    %c0_i32_0 = arith.constant 0 : i32
    %c0_i32_1 = arith.constant 0 : i32
    return %arg0, %c0_i32, %c0_i32_0 : i32, i32, i32
  }
  func.func @transform_1(%arg0: i32) -> (i32, i32, i32) {
    %c0_i32 = arith.constant 0 : i32
    %c0_i32_0 = arith.constant 0 : i32
    %c0_i32_1 = arith.constant 0 : i32
    %c0_i32_2 = arith.constant 0 : i32
    return %c0_i32, %c0_i32_0, %c0_i32_1 : i32, i32, i32
  }
  func.func @transform_2(%arg0: i32) -> (i32, i32, i32) {
    %c0_i32 = arith.constant 0 : i32
    %c0_i32_0 = arith.constant 0 : i32
    %c0_i32_1 = arith.constant 0 : i32
    %c0_i32_2 = arith.constant 0 : i32
    return %c0_i32, %c0_i32_0, %c0_i32_1 : i32, i32, i32
  }
  func.func @transform_3(%arg0: i32) -> (i32, i32, i32, i32) {
    %c0_i32 = arith.constant 0 : i32
    %c0_i32_0 = arith.constant 0 : i32
    %c0_i32_1 = arith.constant 0 : i32
    %c0_i32_2 = arith.constant 0 : i32
    %c0_i32_3 = arith.constant 0 : i32
    return %c0_i32, %c0_i32_0, %c0_i32_1, %c0_i32_2 : i32, i32, i32, i32
  }
  func.func @transform_4(%arg0: i32) -> (i32, i32, i32, i32) {
    %c0_i32 = arith.constant 0 : i32
    %c0_i32_0 = arith.constant 0 : i32
    %c0_i32_1 = arith.constant 0 : i32
    %c0_i32_2 = arith.constant 0 : i32
    %c0_i32_3 = arith.constant 0 : i32
    return %c0_i32, %c0_i32_0, %c0_i32_1, %c0_i32_2 : i32, i32, i32, i32
  }
  func.func @transform_5(%arg0: i32) -> (i32, i32, i32) {
    %c0_i32 = arith.constant 0 : i32
    %c0_i32_0 = arith.constant 0 : i32
    %c0_i32_1 = arith.constant 0 : i32
    %c0_i32_2 = arith.constant 0 : i32
    return %c0_i32, %c0_i32_0, %c0_i32_1 : i32, i32, i32
  }
  func.func @transform_6(%arg0: i32) -> (i32, i32, i32) {
    %c0_i32 = arith.constant 0 : i32
    %c0_i32_0 = arith.constant 0 : i32
    %c0_i32_1 = arith.constant 0 : i32
    return %arg0, %c0_i32, %c0_i32_0 : i32, i32, i32
  }
}

</mosaic_0001>

<llo_original>
// kernel: residual_group_forward.1
$region0: #{residual_group_forward.1}
  #allocation0 [shape = 'u32[]', space=smem, size = 0x4, offset = 0x4, fixed_abs, tag = 'smem constant byte address 0x4 - core index']
  #allocation1 [shape = 'u32[144,128]{1,0:T(1,128)}', space=vmem, size = 0x12000, scoped, tag = 'internal scratch']
  %s0 = inlined_call_operand.vmem [shape: f32[2,8,256], index: 0, kind: input, shape index: {}]
  %s1 = inlined_call_operand.vmem [shape: f32[2,16,72], index: 1, kind: input, shape index: {}]
  %s2 = inlined_call_operand.vmem [shape: f32[2,16,1], index: 2, kind: input, shape index: {}]
  %s3 = inlined_call_operand.vmem [shape: f32[2,2,8,72], index: 3, kind: input, shape index: {}]
  %s4 = inlined_call_operand.vmem [shape: f32[2,2,8,1], index: 4, kind: input, shape index: {}]
  %s5 = inlined_call_operand.vmem [shape: f32[9,1,256], index: 5, kind: input, shape index: {}]
  %s6 = inlined_call_operand.vmem [shape: f32[2,8,256], index: 6, kind: output, shape index: {}]
  %s7 = sld [smem:[#allocation0]]
  $region57: #{residual_group_forward.1} parent=0
    _
  %s9 = ssub.s32 1, %s7
  %s10 = scalar_select 0, %s9, %s7
  loop: start=0, step=1, limit=4
  $region2: #{residual_group_forward.1} parent=0 // loop_pre_header
    _
  $region3: #{residual_group_forward.1} parent=0 // loop_header
    %s12 = sphi 0, %s16
    %p13 = scmp.ge.s32.totalorder %s12, 4
    %s22 = sphi 0, %s24
    %s25 = sphi 0, %s22
    %s26 = sphi 0, %s25
    %s42 = sphi 0, %s26
    %s46 = sphi 0, %s46
    %s48 = sphi 0, %s46
    %s49 = sphi 0, %s48
    %s63 = sphi 0, %s49
    %s67 = sphi 0, %s67
    %s69 = sphi 0, %s67
    %s70 = sphi 0, %s69
    %s84 = sphi 0, %s70
    %s88 = sphi 0, %s88
    %s90 = sphi 0, %s88
    %s91 = sphi 0, %s90
    %s105 = sphi 0, %s91
    %s109 = sphi 0, %s109
    %s111 = sphi 0, %s109
    %s112 = sphi 0, %s111
    %s126 = sphi 0, %s112
    %s130 = sphi 0, %s130
    %s132 = sphi 0, %s130
    %s133 = sphi 0, %s132
    %s147 = sphi 0, %s133
    %s153 = sphi 0, %s155
    %s156 = sphi 0, %s153
    %s157 = sphi 0, %s156
    %s173 = sphi 0, %s157
  $region4: #{residual_group_forward.1} parent=0 // loop_header_branch
    %15 = sbr.rel (%p13) target = $region8
  $region5: #{residual_group_forward.1} parent=0 // loop_body
    %s17 = ssub.s32 %s12, 1
    %s18 = ssub.s32 %s12, 2
    %s19 = sadd.s32 %s12, 1
    %s20 = ssub.s32 %s12, %s19
    %p21 = scmp.eq.s32.totalorder %s20, 0
    %s23 = sadd.s32 %s22, 1
    %s24 = scalar_select %p21, %s22, %s23
    %p27 = pneg %p21
    %p28 = scmp.eq.s32.totalorder %s12, 1
    %p29 = por %p27, %p28
    %p30 = scmp.ne.s32.totalorder %s22, %s25
    %p31 = scmp.eq.s32.totalorder %s12, 0
    %p32 = por %p30, %p31
    %p33 = scmp.ne.s32.totalorder %s22, %s25
    %p34 = scmp.eq.s32.totalorder %s17, 1
    %p35 = por %p33, %p34
    %p36 = scmp.ne.s32.totalorder %s25, %s26
    %p37 = scmp.eq.s32.totalorder %s17, 0
    %p38 = por %p36, %p37
    %p39 = scmp.ne.s32.totalorder %s25, %s26
    %p40 = scmp.eq.s32.totalorder %s18, 1
    %p41 = por %p39, %p40
    %p43 = scmp.ne.s32.totalorder %s26, %s42
    %p44 = scmp.eq.s32.totalorder %s18, 0
    %p45 = por %p43, %p44
    %s47 = sadd.s32 %s46, 1
    %p50 = scmp.eq.s32.totalorder %s12, 1
    %p51 = scmp.ne.s32.totalorder %s46, %s48
    %p52 = scmp.eq.s32.totalorder %s12, 0
    %p53 = por %p51, %p52
    %p54 = scmp.ne.s32.totalorder %s46, %s48
    %p55 = scmp.eq.s32.totalorder %s17, 1
    %p56 = por %p54, %p55
    %p57 = scmp.ne.s32.totalorder %s48, %s49
    %p58 = scmp.eq.s32.totalorder %s17, 0
    %p59 = por %p57, %p58
    %p60 = scmp.ne.s32.totalorder %s48, %s49
    %p61 = scmp.eq.s32.totalorder %s18, 1
    %p62 = por %p60, %p61
    %p64 = scmp.ne.s32.totalorder %s49, %s63
    %p65 = scmp.eq.s32.totalorder %s18, 0
    %p66 = por %p64, %p65
    %s68 = sadd.s32 %s67, 1
    %p71 = scmp.eq.s32.totalorder %s12, 1
    %p72 = scmp.ne.s32.totalorder %s67, %s69
    %p73 = scmp.eq.s32.totalorder %s12, 0
    %p74 = por %p72, %p73
    %p75 = scmp.ne.s32.totalorder %s67, %s69
    %p76 = scmp.eq.s32.totalorder %s17, 1
    %p77 = por %p75, %p76
    %p78 = scmp.ne.s32.totalorder %s69, %s70
    %p79 = scmp.eq.s32.totalorder %s17, 0
    %p80 = por %p78, %p79
    %p81 = scmp.ne.s32.totalorder %s69, %s70
    %p82 = scmp.eq.s32.totalorder %s18, 1
    %p83 = por %p81, %p82
    %p85 = scmp.ne.s32.totalorder %s70, %s84
    %p86 = scmp.eq.s32.totalorder %s18, 0
    %p87 = por %p85, %p86
    %s89 = sadd.s32 %s88, 1
    %p92 = scmp.eq.s32.totalorder %s12, 1
    %p93 = scmp.ne.s32.totalorder %s88, %s90
    %p94 = scmp.eq.s32.totalorder %s12, 0
    %p95 = por %p93, %p94
    %p96 = scmp.ne.s32.totalorder %s88, %s90
    %p97 = scmp.eq.s32.totalorder %s17, 1
    %p98 = por %p96, %p97
    %p99 = scmp.ne.s32.totalorder %s90, %s91
    %p100 = scmp.eq.s32.totalorder %s17, 0
    %p101 = por %p99, %p100
    %p102 = scmp.ne.s32.totalorder %s90, %s91
    %p103 = scmp.eq.s32.totalorder %s18, 1
    %p104 = por %p102, %p103
    %p106 = scmp.ne.s32.totalorder %s91, %s105
    %p107 = scmp.eq.s32.totalorder %s18, 0
    %p108 = por %p106, %p107
    %s110 = sadd.s32 %s109, 1
    %p113 = scmp.eq.s32.totalorder %s12, 1
    %p114 = scmp.ne.s32.totalorder %s109, %s111
    %p115 = scmp.eq.s32.totalorder %s12, 0
    %p116 = por %p114, %p115
    %p117 = scmp.ne.s32.totalorder %s109, %s111
    %p118 = scmp.eq.s32.totalorder %s17, 1
    %p119 = por %p117, %p118
    %p120 = scmp.ne.s32.totalorder %s111, %s112
    %p121 = scmp.eq.s32.totalorder %s17, 0
    %p122 = por %p120, %p121
    %p123 = scmp.ne.s32.totalorder %s111, %s112
    %p124 = scmp.eq.s32.totalorder %s18, 1
    %p125 = por %p123, %p124
    %p127 = scmp.ne.s32.totalorder %s112, %s126
    %p128 = scmp.eq.s32.totalorder %s18, 0
    %p129 = por %p127, %p128
    %s131 = sadd.s32 %s130, 1
    %p134 = scmp.eq.s32.totalorder %s12, 1
    %p135 = scmp.ne.s32.totalorder %s130, %s132
    %p136 = scmp.eq.s32.totalorder %s12, 0
    %p137 = por %p135, %p136
    %p138 = scmp.ne.s32.totalorder %s130, %s132
    %p139 = scmp.eq.s32.totalorder %s17, 1
    %p140 = por %p138, %p139
    %p141 = scmp.ne.s32.totalorder %s132, %s133
    %p142 = scmp.eq.s32.totalorder %s17, 0
    %p143 = por %p141, %p142
    %p144 = scmp.ne.s32.totalorder %s132, %s133
    %p145 = scmp.eq.s32.totalorder %s18, 1
    %p146 = por %p144, %p145
    %p148 = scmp.ne.s32.totalorder %s133, %s147
    %p149 = scmp.eq.s32.totalorder %s18, 0
    %p150 = por %p148, %p149
    %s151 = ssub.s32 %s12, %s19
    %p152 = scmp.eq.s32.totalorder %s151, 0
    %s154 = sadd.s32 %s153, 1
    %s155 = scalar_select %p152, %s153, %s154
    %p158 = pneg %p152
    %p159 = scmp.eq.s32.totalorder %s12, 1
    %p160 = por %p158, %p159
    %p161 = scmp.ne.s32.totalorder %s153, %s156
    %p162 = scmp.eq.s32.totalorder %s12, 0
    %p163 = por %p161, %p162
    %p164 = scmp.ne.s32.totalorder %s153, %s156
    %p165 = scmp.eq.s32.totalorder %s17, 1
    %p166 = por %p164, %p165
    %p167 = scmp.ne.s32.totalorder %s156, %s157
    %p168 = scmp.eq.s32.totalorder %s17, 0
    %p169 = por %p167, %p168
    %p170 = scmp.ne.s32.totalorder %s156, %s157
    %p171 = scmp.eq.s32.totalorder %s18, 1
    %p172 = por %p170, %p171
    %p174 = scmp.ne.s32.totalorder %s157, %s173
    %p175 = scmp.eq.s32.totalorder %s18, 0
    %p176 = por %p174, %p175
    %p177 = scmp.le.s32.totalorder 1, %s12
    %p178 = scmp.lt.s32.totalorder %s12, 3
    %p179 = pnand %p177, %p178
    %p180 = pneg %p179
    // Predicated region
    $region9: #{residual_group_forward.1} parent=5 // pred_check
      _
    $region10: #{residual_group_forward.1} parent=5 // pred_check_branch
      %182 = sbr.rel (%p179) target = $region12
    $region11: #{residual_group_forward.1} parent=5 // pred_region
      %s183 = ssub.s32 %s12, 1
      // Predicated region
      $region13: #{residual_group_forward.1} parent=11 // pred_check
        %p184 = pneg %p59
      $region14: #{residual_group_forward.1} parent=11 // pred_check_branch
        %186 = sbr.rel (%p184) target = $region16
      $region15: #{residual_group_forward.1} parent=11 // pred_region
        _
      $region16: #{residual_group_forward.1} parent=11 // pred_fallthru
        _
      // Predicated region
      $region17: #{residual_group_forward.1} parent=11 // pred_check
        %p187 = pneg %p80
      $region18: #{residual_group_forward.1} parent=11 // pred_check_branch
        %189 = sbr.rel (%p187) target = $region20
      $region19: #{residual_group_forward.1} parent=11 // pred_region
        _
      $region20: #{residual_group_forward.1} parent=11 // pred_fallthru
        _
      // Predicated region
      $region21: #{residual_group_forward.1} parent=11 // pred_check
        %p190 = pneg %p101
      $region22: #{residual_group_forward.1} parent=11 // pred_check_branch
        %192 = sbr.rel (%p190) target = $region24
      $region23: #{residual_group_forward.1} parent=11 // pred_region
        _
      $region24: #{residual_group_forward.1} parent=11 // pred_fallthru
        _
      // Predicated region
      $region25: #{residual_group_forward.1} parent=11 // pred_check
        %p193 = pneg %p122
      $region26: #{residual_group_forward.1} parent=11 // pred_check_branch
        %195 = sbr.rel (%p193) target = $region28
      $region27: #{residual_group_forward.1} parent=11 // pred_region
        _
      $region28: #{residual_group_forward.1} parent=11 // pred_fallthru
        _
      // Predicated region
      $region29: #{residual_group_forward.1} parent=11 // pred_check
        %p196 = pneg %p143
      $region30: #{residual_group_forward.1} parent=11 // pred_check_branch
        %198 = sbr.rel (%p196) target = $region32
      $region31: #{residual_group_forward.1} parent=11 // pred_region
        _
      $region32: #{residual_group_forward.1} parent=11 // pred_fallthru
        _
    $region12: #{residual_group_forward.1} parent=5 // pred_fallthru
      _
    %p199 = scmp.lt.s32.totalorder %s12, 2
    // Predicated region
    $region33: #{residual_group_forward.1} parent=5 // pred_check
      %p200 = pneg %p199
    $region34: #{residual_group_forward.1} parent=5 // pred_check_branch
      %202 = sbr.rel (%p200) target = $region36
    $region35: #{residual_group_forward.1} parent=5 // pred_region
      // Predicated region
      $region37: #{residual_group_forward.1} parent=35 // pred_check
        %p203 = pneg %p32
      $region38: #{residual_group_forward.1} parent=35 // pred_check_branch
        %205 = sbr.rel (%p203) target = $region40
      $region39: #{residual_group_forward.1} parent=35 // pred_region
        %p206 = scmp.lt.s32.totalorder %s12, 1
        %s207 = scalar_select %p206, %s12, 1
        %s208 = smul.addr %s207, 2
        %s209 = smul.addr %s208, 8
        %s210 = scalar_lea.vmem %s0, %s209
      $region40: #{residual_group_forward.1} parent=35 // pred_fallthru
        _
    $region36: #{residual_group_forward.1} parent=5 // pred_fallthru
      _
    %p211 = scmp.le.s32.totalorder 1, %s12
    %p212 = scmp.lt.s32.totalorder %s12, 3
    %p213 = pnand %p211, %p212
    %p214 = pneg %p213
    // Predicated region
    $region41: #{residual_group_forward.1} parent=5 // pred_check
      _
    $region42: #{residual_group_forward.1} parent=5 // pred_check_branch
      %216 = sbr.rel (%p213) target = $region44
    $region43: #{residual_group_forward.1} parent=5 // pred_region
      %s217 = ssub.s32 %s12, 1
      %p218 = scmp.lt.s32.totalorder %s17, 1
      %s219 = scalar_select %p218, %s17, 1
      %s220 = smul.addr %s219, 2
      %s221 = smul.addr %s220, 8
      %s222 = scalar_lea.vmem %s0, %s221
      %p223 = pneg %p38
      %p224 = pneg %p35
      %p225 = pneg %p59
      %p226 = pneg %p56
      %p227 = pneg %p80
      %p228 = pneg %p77
      %p229 = pneg %p101
      %p230 = pneg %p98
      %p231 = pneg %p122
      %p232 = pneg %p119
      %p233 = pneg %p143
      %p234 = pneg %p140
      %p235 = pneg %p169
      %p236 = pneg %p166
      %p237 = scmp.lt.s32.totalorder %s17, 1
      %s238 = scalar_select %p237, %s17, 1
      %s239 = smul.addr %s238, 2
      %s240 = smul.addr %s239, 8
      %s241 = scalar_lea.vmem %s6, %s240
      %p242 = scmp.lt.s32.totalorder %s17, 1
      %s243 = scalar_select %p242, %s17, 1
      %s244 = smul.addr %s243, 2
      %s245 = smul.addr %s244, 8
      %s246 = scalar_lea.vmem %s0, %s245
      %p247 = scmp.lt.s32.totalorder %s17, 1
      %s248 = scalar_select %p247, %s17, 1
      %s249 = smul.addr %s248, 2
      %s250 = smul.addr %s249, 8
      %s251 = scalar_lea.vmem %s6, %s250
      %v252 = vld [vmem:[%s5] sm:$0x3]
      %s253 = scalar_lea.vmem %s5, 2
      %v254 = vld [vmem:[%s253] sm:$0x3]
      %s255 = scalar_lea.vmem %s5, 4
      %v256 = vld [vmem:[%s255] sm:$0x3]
      %s257 = scalar_lea.vmem %s5, 6
      %v258 = vld [vmem:[%s257] sm:$0x3]
      %s259 = scalar_lea.vmem %s5, 10
      %v260 = vld [vmem:[%s259] sm:$0x3]
      %s261 = scalar_lea.vmem %s5, 12
      %v262 = vld [vmem:[%s261] sm:$0x3]
      %s263 = scalar_lea.vmem %s5, 14
      %v264 = vld [vmem:[%s263] sm:$0x3]
      %s265 = scalar_lea.vmem %s5, 16
      %v266 = vld [vmem:[%s265] sm:$0x3]
      %v267 = vld [vmem:[%s246] sm:$0xff]
      %v268 = vld [vmem:[%s246 + $0x8] sm:$0xff]
      %v269 = vmax.f32 %v267, 0.0
      %v270 = vmax.f32 %v268, 0.0
      %271 = vrot.lane.b32.xlu0 %v269, 17
      %v272 = vpop.permute.xlu0 %271
      %273 = vrot.lane.b32.xlu0 %v270, 17
      %v274 = vpop.permute.xlu0 %273
      %v275 = vlaneseq
      %v276 = vand.u32 %v275, 127
      %vm277 = vcmp.lt.s32.totalorder %v276, 17
      %v278 = vsel %vm277, %v272, %v274
      %v279 = vsel %vm277, %v274, %v272
      %v281 = vlaneseq
      %v282 = vshrl.u32 %v281, 7
      %v283 = vsub.s32 0, %v282
      %v284 = vrot.slane %v252, %v283
      %v285 = vlaneseq
      %v286 = vshrl.u32 %v285, 7
      %v287 = vsub.s32 1, %v286
      %v288 = vrot.slane %v252, %v287
      %v291 = vmul.f32 %v279, %v284
      %v292 = vmul.f32 %v278, %v288
      %293 = vrot.lane.b32.xlu0 %v269, 16
      %v294 = vpop.permute.xlu0 %293
      %295 = vrot.lane.b32.xlu0 %v270, 16
      %v296 = vpop.permute.xlu0 %295
      %vm297 = vcmp.lt.s32.totalorder %v276, 16
      %v298 = vsel %vm297, %v294, %v296
      %v299 = vsel %vm297, %v296, %v294
      %v301 = vlaneseq
      %v302 = vshrl.u32 %v301, 7
      %v303 = vsub.s32 0, %v302
      %v304 = vrot.slane %v254, %v303
      %v305 = vlaneseq
      %v306 = vshrl.u32 %v305, 7
      %v307 = vsub.s32 1, %v306
      %v308 = vrot.slane %v254, %v307
      %v311 = vmul.f32 %v299, %v304
      %v312 = vmul.f32 %v298, %v308
      %313 = vrot.lane.b32.xlu0 %v269, 15
      %v314 = vpop.permute.xlu0 %313
      %315 = vrot.lane.b32.xlu0 %v270, 15
      %v316 = vpop.permute.xlu0 %315
      %vm317 = vcmp.lt.s32.totalorder %v276, 15
      %v318 = vsel %vm317, %v314, %v316
      %v319 = vsel %vm317, %v316, %v314
      %v321 = vlaneseq
      %v322 = vshrl.u32 %v321, 7
      %v323 = vsub.s32 0, %v322
      %v324 = vrot.slane %v256, %v323
      %v325 = vlaneseq
      %v326 = vshrl.u32 %v325, 7
      %v327 = vsub.s32 1, %v326
      %v328 = vrot.slane %v256, %v327
      %v331 = vmul.f32 %v319, %v324
      %v332 = vmul.f32 %v318, %v328
      %333 = vrot.lane.b32.xlu0 %v269, 1
      %v334 = vpop.permute.xlu0 %333
      %335 = vrot.lane.b32.xlu0 %v270, 1
      %v336 = vpop.permute.xlu0 %335
      %vm337 = vcmp.lt.s32.totalorder %v276, 1
      %v338 = vsel %vm337, %v334, %v336
      %v339 = vsel %vm337, %v336, %v334
      %v341 = vlaneseq
      %v342 = vshrl.u32 %v341, 7
      %v343 = vsub.s32 0, %v342
      %v344 = vrot.slane %v258, %v343
      %v345 = vlaneseq
      %v346 = vshrl.u32 %v345, 7
      %v347 = vsub.s32 1, %v346
      %v348 = vrot.slane %v258, %v347
      %v351 = vmul.f32 %v339, %v344
      %v352 = vmul.f32 %v338, %v348
      %353 = vrot.lane.b32.xlu0 %v269, 127
      %v354 = vpop.permute.xlu0 %353
      %355 = vrot.lane.b32.xlu0 %v270, 127
      %v356 = vpop.permute.xlu0 %355
      %vm357 = vcmp.lt.s32.totalorder %v276, 127
      %v358 = vsel %vm357, %v354, %v356
      %v359 = vsel %vm357, %v356, %v354
      %v361 = vlaneseq
      %v362 = vshrl.u32 %v361, 7
      %v363 = vsub.s32 0, %v362
      %v364 = vrot.slane %v260, %v363
      %v365 = vlaneseq
      %v366 = vshrl.u32 %v365, 7
      %v367 = vsub.s32 1, %v366
      %v368 = vrot.slane %v260, %v367
      %v371 = vmul.f32 %v358, %v364
      %v372 = vmul.f32 %v359, %v368
      %373 = vrot.lane.b32.xlu0 %v269, 113
      %v374 = vpop.permute.xlu0 %373
      %375 = vrot.lane.b32.xlu0 %v270, 113
      %v376 = vpop.permute.xlu0 %375
      %vm377 = vcmp.lt.s32.totalorder %v276, 113
      %v378 = vsel %vm377, %v374, %v376
      %v379 = vsel %vm377, %v376, %v374
      %v381 = vlaneseq
      %v382 = vshrl.u32 %v381, 7
      %v383 = vsub.s32 0, %v382
      %v384 = vrot.slane %v262, %v383
      %v385 = vlaneseq
      %v386 = vshrl.u32 %v385, 7
      %v387 = vsub.s32 1, %v386
      %v388 = vrot.slane %v262, %v387
      %v391 = vmul.f32 %v378, %v384
      %v392 = vmul.f32 %v379, %v388
      %393 = vrot.lane.b32.xlu0 %v269, 112
      %v394 = vpop.permute.xlu0 %393
      %395 = vrot.lane.b32.xlu0 %v270, 112
      %v396 = vpop.permute.xlu0 %395
      %vm397 = vcmp.lt.s32.totalorder %v276, 112
      %v398 = vsel %vm397, %v394, %v396
      %v399 = vsel %vm397, %v396, %v394
      %v401 = vlaneseq
      %v402 = vshrl.u32 %v401, 7
      %v403 = vsub.s32 0, %v402
      %v404 = vrot.slane %v264, %v403
      %v405 = vlaneseq
      %v406 = vshrl.u32 %v405, 7
      %v407 = vsub.s32 1, %v406
      %v408 = vrot.slane %v264, %v407
      %v411 = vmul.f32 %v398, %v404
      %v412 = vmul.f32 %v399, %v408
      %413 = vrot.lane.b32.xlu0 %v269, 111
      %v414 = vpop.permute.xlu0 %413
      %415 = vrot.lane.b32.xlu0 %v270, 111
      %v416 = vpop.permute.xlu0 %415
      %vm417 = vcmp.lt.s32.totalorder %v276, 111
      %v418 = vsel %vm417, %v414, %v416
      %v419 = vsel %vm417, %v416, %v414
      %v421 = vlaneseq
      %v422 = vshrl.u32 %v421, 7
      %v423 = vsub.s32 0, %v422
      %v424 = vrot.slane %v266, %v423
      %v425 = vlaneseq
      %v426 = vshrl.u32 %v425, 7
      %v427 = vsub.s32 1, %v426
      %v428 = vrot.slane %v266, %v427
      %v431 = vmul.f32 %v418, %v424
      %v432 = vmul.f32 %v419, %v428
      %v433 = vld [vmem:[%s1] sm:$0xff]
      %v434 = vld [vmem:[%s1 + $0x8] sm:$0xff]
      %v435 = vld [vmem:[%s2] sm:$0xff]
      %v436 = vld [vmem:[%s2 + $0x8] sm:$0xff]
      %438 = vset.pattern.permute.xlu0 0
      %439 = vperm.xlu0 %438, %v435
      %v440 = vpop.permute.xlu0 %439
      %443 = vset.pattern.permute.xlu0 0
      %444 = vperm.xlu0 %443, %v436
      %v445 = vpop.permute.xlu0 %444
      %vm447 = vcmask 588800
      %v449 = vsel %vm447, %v433, 0
      %v452 = vsel %vm447, %v434, 0
      %454 = vmatprep.subr.mxu0 %v292
      %455 = vmatpush1.msra.mxu0 %v291
      %456 = vmatprep.subr.mxu0 %v312
      %457 = vmatpush1.msra.mxu0 %v311
      %458 = vmatprep.subr.mxu0 %v332
      %459 = vmatpush1.msra.mxu0 %v331
      %460 = vmatprep.subr.mxu0 %v352
      %461 = vmatpush1.msra.mxu0 %v351
      %462 = vmatprep.subr.mxu0 %v270
      %463 = vmatpush1.msra.mxu0 %v269
      %464 = vmatprep.subr.mxu0 %v372
      %465 = vmatpush1.msra.mxu0 %v371
      %466 = vmatprep.subr.mxu0 %v392
      %467 = vmatpush1.msra.mxu0 %v391
      %468 = vmatprep.subr.mxu0 %v412
      %469 = vmatpush1.msra.mxu0 %v411
      %470 = vmatprep.subr.mxu0 %v432
      %471 = vmatpush1.msra.mxu0 %v431
      %472 = vmatprep.subr.mxu0 0.0
      %473 = vmatpush1.msra.mxu0 0.0
      %474 = vmatprep.subr.mxu0 0.0
      %475 = vmatpush1.msra.mxu0 0.0
      %476 = vmatprep.subr.mxu0 0.0
      %477 = vmatpush1.msra.mxu0 0.0
      %478 = vmatprep.subr.mxu0 0.0
      %479 = vmatpush1.msra.mxu0 0.0
      %480 = vmatprep.subr.mxu0 0.0
      %481 = vmatpush1.msra.mxu0 0.0
      %482 = vmatprep.subr.mxu0 0.0
      %483 = vmatpush1.msra.mxu0 0.0
      %484 = vmatprep.subr.mxu0 0.0
      %485 = vmatpush1.msra.mxu0 0.0
      %486 = vmatprep.subr.mxu0 0.0
      %487 = vmatpush1.msra.mxu0 0.0
      %488 = vmatprep.subr.mxu0 0.0
      %489 = vmatpush1.msra.mxu0 0.0
      %490 = vmatprep.subr.mxu0 0.0
      %491 = vmatpush1.msra.mxu0 0.0
      %492 = vmatprep.subr.mxu0 0.0
      %493 = vmatpush1.msra.mxu0 0.0
      %494 = vmatprep.subr.mxu0 0.0
      %495 = vmatpush1.msra.mxu0 0.0
      %496 = vmatprep.subr.mxu0 0.0
      %497 = vmatpush1.msra.mxu0 0.0
      %498 = vmatprep.subr.mxu0 0.0
      %499 = vmatpush1.msra.mxu0 0.0
      %500 = vmatprep.subr.mxu0 0.0
      %501 = vmatpush1.msra.mxu0 0.0
      %502 = vmatprep.subr.mxu0 0.0
      %503 = vmatpush1.msra.mxu0 0.0
      %504 = vmatprep.subr.mxu0 0.0
      %505 = vmatpush1.msra.mxu0 0.0
      %506 = vmatprep.subr.mxu0 0.0
      %507 = vmatpush1.msra.mxu0 0.0
      %508 = vmatprep.subr.mxu0 0.0
      %509 = vmatpush1.msra.mxu0 0.0
      %510 = vmatprep.subr.mxu0 0.0
      %511 = vmatpush1.msra.mxu0 0.0
      %512 = vmatprep.subr.mxu0 0.0
      %513 = vmatpush1.msra.mxu0 0.0
      %514 = vmatprep.subr.mxu0 0.0
      %515 = vmatpush1.msra.mxu0 0.0
      %516 = vmatprep.subr.mxu0 0.0
      %517 = vmatpush1.msra.mxu0 0.0
      %518 = vmatprep.mubr.f32.mxu0 0.0
      %519 = vmatmul.mubr.f32.gmra.mrb[0].mxu0 %v449
      %v520 = vpop.f32.mrb[0].mxu0
      %v521 = vadd.f32 %v440, %v520
      %v522 = vpop.f32.mrb[0].mxu0
      %v523 = vadd.f32 %v440, %v522
      %524 = vmatprep.mubr.f32.mxu0 0.0
      %525 = vmatmul.mubr.f32.gmra.mrb[0].mxu0 %v452
      %v526 = vpop.f32.mrb[0].mxu0
      %v527 = vadd.f32 %v445, %v526
      %v528 = vpop.f32.mrb[0].mxu0
      %v529 = vadd.f32 %v445, %v528
      %530 = vdwg.mxu0
      %v531 = vmax.f32 %v521, 0.0
      %v532 = vmax.f32 %v523, 0.0
      %533 = vrot.lane.b32.xlu0 %v531, 17
      %v534 = vpop.permute.xlu0 %533
      %535 = vrot.lane.b32.xlu0 %v532, 17
      %v536 = vpop.permute.xlu0 %535
      %v537 = vsel %vm277, %v534, %v536
      %v538 = vsel %vm277, %v536, %v534
      %v539 = vmul.f32 %v538, %v284
      %v540 = vmul.f32 %v537, %v288
      %541 = vrot.lane.b32.xlu0 %v531, 16
      %v542 = vpop.permute.xlu0 %541
      %543 = vrot.lane.b32.xlu0 %v532, 16
      %v544 = vpop.permute.xlu0 %543
      %v545 = vsel %vm297, %v542, %v544
      %v546 = vsel %vm297, %v544, %v542
      %v547 = vmul.f32 %v546, %v304
      %v548 = vmul.f32 %v545, %v308
      %549 = vrot.lane.b32.xlu0 %v531, 15
      %v550 = vpop.permute.xlu0 %549
      %551 = vrot.lane.b32.xlu0 %v532, 15
      %v552 = vpop.permute.xlu0 %551
      %v553 = vsel %vm317, %v550, %v552
      %v554 = vsel %vm317, %v552, %v550
      %v555 = vmul.f32 %v554, %v324
      %v556 = vmul.f32 %v553, %v328
      %557 = vrot.lane.b32.xlu0 %v531, 1
      %v558 = vpop.permute.xlu0 %557
      %559 = vrot.lane.b32.xlu0 %v532, 1
      %v560 = vpop.permute.xlu0 %559
      %v561 = vsel %vm337, %v558, %v560
      %v562 = vsel %vm337, %v560, %v558
      %v563 = vmul.f32 %v562, %v344
      %v564 = vmul.f32 %v561, %v348
      %565 = vrot.lane.b32.xlu0 %v531, 127
      %v566 = vpop.permute.xlu0 %565
      %567 = vrot.lane.b32.xlu0 %v532, 127
      %v568 = vpop.permute.xlu0 %567
      %v569 = vsel %vm357, %v566, %v568
      %v570 = vsel %vm357, %v568, %v566
      %v571 = vmul.f32 %v569, %v364
      %v572 = vmul.f32 %v570, %v368
      %573 = vrot.lane.b32.xlu0 %v531, 113
      %v574 = vpop.permute.xlu0 %573
      %575 = vrot.lane.b32.xlu0 %v532, 113
      %v576 = vpop.permute.xlu0 %575
      %v577 = vsel %vm377, %v574, %v576
      %v578 = vsel %vm377, %v576, %v574
      %v579 = vmul.f32 %v577, %v384
      %v580 = vmul.f32 %v578, %v388
      %581 = vrot.lane.b32.xlu0 %v531, 112
      %v582 = vpop.permute.xlu0 %581
      %583 = vrot.lane.b32.xlu0 %v532, 112
      %v584 = vpop.permute.xlu0 %583
      %v585 = vsel %vm397, %v582, %v584
      %v586 = vsel %vm397, %v584, %v582
      %v587 = vmul.f32 %v585, %v404
      %v588 = vmul.f32 %v586, %v408
      %589 = vrot.lane.b32.xlu0 %v531, 111
      %v590 = vpop.permute.xlu0 %589
      %591 = vrot.lane.b32.xlu0 %v532, 111
      %v592 = vpop.permute.xlu0 %591
      %v593 = vsel %vm417, %v590, %v592
      %v594 = vsel %vm417, %v592, %v590
      %v595 = vmul.f32 %v593, %v424
      %v596 = vmul.f32 %v594, %v428
      %v597 = vld [vmem:[%s3] sm:$0xff]
      %v598 = vld [vmem:[%s4] sm:$0xff]
      %600 = vset.pattern.permute.xlu0 0
      %601 = vperm.xlu0 %600, %v598
      %v602 = vpop.permute.xlu0 %601
      %v605 = vsel %vm447, %v597, 0
      %607 = vmatprep.subr.mxu0 %v540
      %608 = vmatpush1.msra.mxu0 %v539
      %609 = vmatprep.subr.mxu0 %v548
      %610 = vmatpush1.msra.mxu0 %v547
      %611 = vmatprep.subr.mxu0 %v556
      %612 = vmatpush1.msra.mxu0 %v555
      %613 = vmatprep.subr.mxu0 %v564
      %614 = vmatpush1.msra.mxu0 %v563
      %615 = vmatprep.subr.mxu0 %v532
      %616 = vmatpush1.msra.mxu0 %v531
      %617 = vmatprep.subr.mxu0 %v572
      %618 = vmatpush1.msra.mxu0 %v571
      %619 = vmatprep.subr.mxu0 %v580
      %620 = vmatpush1.msra.mxu0 %v579
      %621 = vmatprep.subr.mxu0 %v588
      %622 = vmatpush1.msra.mxu0 %v587
      %623 = vmatprep.subr.mxu0 %v596
      %624 = vmatpush1.msra.mxu0 %v595
      %625 = vmatprep.subr.mxu0 0.0
      %626 = vmatpush1.msra.mxu0 0.0
      %627 = vmatprep.subr.mxu0 0.0
      %628 = vmatpush1.msra.mxu0 0.0
      %629 = vmatprep.subr.mxu0 0.0
      %630 = vmatpush1.msra.mxu0 0.0
      %631 = vmatprep.subr.mxu0 0.0
      %632 = vmatpush1.msra.mxu0 0.0
      %633 = vmatprep.subr.mxu0 0.0
      %634 = vmatpush1.msra.mxu0 0.0
      %635 = vmatprep.subr.mxu0 0.0
      %636 = vmatpush1.msra.mxu0 0.0
      %637 = vmatprep.subr.mxu0 0.0
      %638 = vmatpush1.msra.mxu0 0.0
      %639 = vmatprep.subr.mxu0 0.0
      %640 = vmatpush1.msra.mxu0 0.0
      %641 = vmatprep.subr.mxu0 0.0
      %642 = vmatpush1.msra.mxu0 0.0
      %643 = vmatprep.subr.mxu0 0.0
      %644 = vmatpush1.msra.mxu0 0.0
      %645 = vmatprep.subr.mxu0 0.0
      %646 = vmatpush1.msra.mxu0 0.0
      %647 = vmatprep.subr.mxu0 0.0
      %648 = vmatpush1.msra.mxu0 0.0
      %649 = vmatprep.subr.mxu0 0.0
      %650 = vmatpush1.msra.mxu0 0.0
      %651 = vmatprep.subr.mxu0 0.0
      %652 = vmatpush1.msra.mxu0 0.0
      %653 = vmatprep.subr.mxu0 0.0
      %654 = vmatpush1.msra.mxu0 0.0
      %655 = vmatprep.subr.mxu0 0.0
      %656 = vmatpush1.msra.mxu0 0.0
      %657 = vmatprep.subr.mxu0 0.0
      %658 = vmatpush1.msra.mxu0 0.0
      %659 = vmatprep.subr.mxu0 0.0
      %660 = vmatpush1.msra.mxu0 0.0
      %661 = vmatprep.subr.mxu0 0.0
      %662 = vmatpush1.msra.mxu0 0.0
      %663 = vmatprep.subr.mxu0 0.0
      %664 = vmatpush1.msra.mxu0 0.0
      %665 = vmatprep.subr.mxu0 0.0
      %666 = vmatpush1.msra.mxu0 0.0
      %667 = vmatprep.subr.mxu0 0.0
      %668 = vmatpush1.msra.mxu0 0.0
      %669 = vmatprep.subr.mxu0 0.0
      %670 = vmatpush1.msra.mxu0 0.0
      %671 = vmatprep.mubr.f32.mxu0 0.0
      %672 = vmatmul.mubr.f32.gmra.mrb[0].mxu0 %v605
      %v673 = vpop.f32.mrb[0].mxu0
      %v674 = vadd.f32 %v602, %v673
      %v675 = vpop.f32.mrb[0].mxu0
      %v676 = vadd.f32 %v602, %v675
      %677 = vdwg.mxu0
      %v678 = vmax.f32 %v527, 0.0
      %v679 = vmax.f32 %v529, 0.0
      %680 = vrot.lane.b32.xlu0 %v678, 17
      %v681 = vpop.permute.xlu0 %680
      %682 = vrot.lane.b32.xlu0 %v679, 17
      %v683 = vpop.permute.xlu0 %682
      %v684 = vsel %vm277, %v681, %v683
      %v685 = vsel %vm277, %v683, %v681
      %v686 = vmul.f32 %v685, %v284
      %v687 = vmul.f32 %v684, %v288
      %688 = vrot.lane.b32.xlu0 %v678, 16
      %v689 = vpop.permute.xlu0 %688
      %690 = vrot.lane.b32.xlu0 %v679, 16
      %v691 = vpop.permute.xlu0 %690
      %v692 = vsel %vm297, %v689, %v691
      %v693 = vsel %vm297, %v691, %v689
      %v694 = vmul.f32 %v693, %v304
      %v695 = vmul.f32 %v692, %v308
      %696 = vrot.lane.b32.xlu0 %v678, 15
      %v697 = vpop.permute.xlu0 %696
      %698 = vrot.lane.b32.xlu0 %v679, 15
      %v699 = vpop.permute.xlu0 %698
      %v700 = vsel %vm317, %v697, %v699
      %v701 = vsel %vm317, %v699, %v697
      %v702 = vmul.f32 %v701, %v324
      %v703 = vmul.f32 %v700, %v328
      %704 = vrot.lane.b32.xlu0 %v678, 1
      %v705 = vpop.permute.xlu0 %704
      %706 = vrot.lane.b32.xlu0 %v679, 1
      %v707 = vpop.permute.xlu0 %706
      %v708 = vsel %vm337, %v705, %v707
      %v709 = vsel %vm337, %v707, %v705
      %v710 = vmul.f32 %v709, %v344
      %v711 = vmul.f32 %v708, %v348
      %712 = vrot.lane.b32.xlu0 %v678, 127
      %v713 = vpop.permute.xlu0 %712
      %714 = vrot.lane.b32.xlu0 %v679, 127
      %v715 = vpop.permute.xlu0 %714
      %v716 = vsel %vm357, %v713, %v715
      %v717 = vsel %vm357, %v715, %v713
      %v718 = vmul.f32 %v716, %v364
      %v719 = vmul.f32 %v717, %v368
      %720 = vrot.lane.b32.xlu0 %v678, 113
      %v721 = vpop.permute.xlu0 %720
      %722 = vrot.lane.b32.xlu0 %v679, 113
      %v723 = vpop.permute.xlu0 %722
      %v724 = vsel %vm377, %v721, %v723
      %v725 = vsel %vm377, %v723, %v721
      %v726 = vmul.f32 %v724, %v384
      %v727 = vmul.f32 %v725, %v388
      %728 = vrot.lane.b32.xlu0 %v678, 112
      %v729 = vpop.permute.xlu0 %728
      %730 = vrot.lane.b32.xlu0 %v679, 112
      %v731 = vpop.permute.xlu0 %730
      %v732 = vsel %vm397, %v729, %v731
      %v733 = vsel %vm397, %v731, %v729
      %v734 = vmul.f32 %v732, %v404
      %v735 = vmul.f32 %v733, %v408
      %736 = vrot.lane.b32.xlu0 %v678, 111
      %v737 = vpop.permute.xlu0 %736
      %738 = vrot.lane.b32.xlu0 %v679, 111
      %v739 = vpop.permute.xlu0 %738
      %v740 = vsel %vm417, %v737, %v739
      %v741 = vsel %vm417, %v739, %v737
      %v742 = vmul.f32 %v740, %v424
      %v743 = vmul.f32 %v741, %v428
      %s744 = scalar_lea.vmem %s3, 8
      %v745 = vld [vmem:[%s744] sm:$0xff]
      %s746 = scalar_lea.vmem %s4, 8
      %v747 = vld [vmem:[%s746] sm:$0xff]
      %749 = vset.pattern.permute.xlu0 0
      %750 = vperm.xlu0 %749, %v747
      %v751 = vpop.permute.xlu0 %750
      %v754 = vsel %vm447, %v745, 0
      %756 = vmatprep.subr.mxu0 %v687
      %757 = vmatpush1.msra.mxu0 %v686
      %758 = vmatprep.subr.mxu0 %v695
      %759 = vmatpush1.msra.mxu0 %v694
      %760 = vmatprep.subr.mxu0 %v703
      %761 = vmatpush1.msra.mxu0 %v702
      %762 = vmatprep.subr.mxu0 %v711
      %763 = vmatpush1.msra.mxu0 %v710
      %764 = vmatprep.subr.mxu0 %v679
      %765 = vmatpush1.msra.mxu0 %v678
      %766 = vmatprep.subr.mxu0 %v719
      %767 = vmatpush1.msra.mxu0 %v718
      %768 = vmatprep.subr.mxu0 %v727
      %769 = vmatpush1.msra.mxu0 %v726
      %770 = vmatprep.subr.mxu0 %v735
      %771 = vmatpush1.msra.mxu0 %v734
      %772 = vmatprep.subr.mxu0 %v743
      %773 = vmatpush1.msra.mxu0 %v742
      %774 = vmatprep.subr.mxu0 0.0
      %775 = vmatpush1.msra.mxu0 0.0
      %776 = vmatprep.subr.mxu0 0.0
      %777 = vmatpush1.msra.mxu0 0.0
      %778 = vmatprep.subr.mxu0 0.0
      %779 = vmatpush1.msra.mxu0 0.0
      %780 = vmatprep.subr.mxu0 0.0
      %781 = vmatpush1.msra.mxu0 0.0
      %782 = vmatprep.subr.mxu0 0.0
      %783 = vmatpush1.msra.mxu0 0.0
      %784 = vmatprep.subr.mxu0 0.0
      %785 = vmatpush1.msra.mxu0 0.0
      %786 = vmatprep.subr.mxu0 0.0
      %787 = vmatpush1.msra.mxu0 0.0
      %788 = vmatprep.subr.mxu0 0.0
      %789 = vmatpush1.msra.mxu0 0.0
      %790 = vmatprep.subr.mxu0 0.0
      %791 = vmatpush1.msra.mxu0 0.0
      %792 = vmatprep.subr.mxu0 0.0
      %793 = vmatpush1.msra.mxu0 0.0
      %794 = vmatprep.subr.mxu0 0.0
      %795 = vmatpush1.msra.mxu0 0.0
      %796 = vmatprep.subr.mxu0 0.0
      %797 = vmatpush1.msra.mxu0 0.0
      %798 = vmatprep.subr.mxu0 0.0
      %799 = vmatpush1.msra.mxu0 0.0
      %800 = vmatprep.subr.mxu0 0.0
      %801 = vmatpush1.msra.mxu0 0.0
      %802 = vmatprep.subr.mxu0 0.0
      %803 = vmatpush1.msra.mxu0 0.0
      %804 = vmatprep.subr.mxu0 0.0
      %805 = vmatpush1.msra.mxu0 0.0
      %806 = vmatprep.subr.mxu0 0.0
      %807 = vmatpush1.msra.mxu0 0.0
      %808 = vmatprep.subr.mxu0 0.0
      %809 = vmatpush1.msra.mxu0 0.0
      %810 = vmatprep.subr.mxu0 0.0
      %811 = vmatpush1.msra.mxu0 0.0
      %812 = vmatprep.subr.mxu0 0.0
      %813 = vmatpush1.msra.mxu0 0.0
      %814 = vmatprep.subr.mxu0 0.0
      %815 = vmatpush1.msra.mxu0 0.0
      %816 = vmatprep.subr.mxu0 0.0
      %817 = vmatpush1.msra.mxu0 0.0
      %818 = vmatprep.subr.mxu0 0.0
      %819 = vmatpush1.msra.mxu0 0.0
      %820 = vmatprep.mubr.f32.mxu0 0.0
      %821 = vmatmul.mubr.f32.gmra.mrb[0].mxu0 %v754
      %v822 = vpop.f32.mrb[0].mxu0
      %v823 = vadd.f32 %v751, %v822
      %v824 = vpop.f32.mrb[0].mxu0
      %v825 = vadd.f32 %v751, %v824
      %826 = vdwg.mxu0
      %v827 = vadd.f32 %v674, %v823
      %v828 = vadd.f32 %v676, %v825
      %v829 = vadd.f32 %v827, %v267
      %v830 = vadd.f32 %v828, %v268
      %v831 = vmax.f32 %v829, 0.0
      %v832 = vmax.f32 %v830, 0.0
      %833 = vrot.lane.b32.xlu0 %v831, 17
      %v834 = vpop.permute.xlu0 %833
      %835 = vrot.lane.b32.xlu0 %v832, 17
      %v836 = vpop.permute.xlu0 %835
      %v837 = vsel %vm277, %v834, %v836
      %v838 = vsel %vm277, %v836, %v834
      %v839 = vmul.f32 %v838, %v284
      %v840 = vmul.f32 %v837, %v288
      %841 = vrot.lane.b32.xlu0 %v831, 16
      %v842 = vpop.permute.xlu0 %841
      %843 = vrot.lane.b32.xlu0 %v832, 16
      %v844 = vpop.permute.xlu0 %843
      %v845 = vsel %vm297, %v842, %v844
      %v846 = vsel %vm297, %v844, %v842
      %v847 = vmul.f32 %v846, %v304
      %v848 = vmul.f32 %v845, %v308
      %849 = vrot.lane.b32.xlu0 %v831, 15
      %v850 = vpop.permute.xlu0 %849
      %851 = vrot.lane.b32.xlu0 %v832, 15
      %v852 = vpop.permute.xlu0 %851
      %v853 = vsel %vm317, %v850, %v852
      %v854 = vsel %vm317, %v852, %v850
      %v855 = vmul.f32 %v854, %v324
      %v856 = vmul.f32 %v853, %v328
      %857 = vrot.lane.b32.xlu0 %v831, 1
      %v858 = vpop.permute.xlu0 %857
      %859 = vrot.lane.b32.xlu0 %v832, 1
      %v860 = vpop.permute.xlu0 %859
      %v861 = vsel %vm337, %v858, %v860
      %v862 = vsel %vm337, %v860, %v858
      %v863 = vmul.f32 %v862, %v344
      %v864 = vmul.f32 %v861, %v348
      %865 = vrot.lane.b32.xlu0 %v831, 127
      %v866 = vpop.permute.xlu0 %865
      %867 = vrot.lane.b32.xlu0 %v832, 127
      %v868 = vpop.permute.xlu0 %867
      %v869 = vsel %vm357, %v866, %v868
      %v870 = vsel %vm357, %v868, %v866
      %v871 = vmul.f32 %v869, %v364
      %v872 = vmul.f32 %v870, %v368
      %873 = vrot.lane.b32.xlu0 %v831, 113
      %v874 = vpop.permute.xlu0 %873
      %875 = vrot.lane.b32.xlu0 %v832, 113
      %v876 = vpop.permute.xlu0 %875
      %v877 = vsel %vm377, %v874, %v876
      %v878 = vsel %vm377, %v876, %v874
      %v879 = vmul.f32 %v877, %v384
      %v880 = vmul.f32 %v878, %v388
      %881 = vrot.lane.b32.xlu0 %v831, 112
      %v882 = vpop.permute.xlu0 %881
      %883 = vrot.lane.b32.xlu0 %v832, 112
      %v884 = vpop.permute.xlu0 %883
      %v885 = vsel %vm397, %v882, %v884
      %v886 = vsel %vm397, %v884, %v882
      %v887 = vmul.f32 %v885, %v404
      %v888 = vmul.f32 %v886, %v408
      %889 = vrot.lane.b32.xlu0 %v831, 111
      %v890 = vpop.permute.xlu0 %889
      %891 = vrot.lane.b32.xlu0 %v832, 111
      %v892 = vpop.permute.xlu0 %891
      %v893 = vsel %vm417, %v890, %v892
      %v894 = vsel %vm417, %v892, %v890
      %v895 = vmul.f32 %v893, %v424
      %v896 = vmul.f32 %v894, %v428
      %s897 = scalar_lea.vmem %s1, 16
      %v898 = vld [vmem:[%s897] sm:$0xff]
      %v899 = vld [vmem:[%s897 + $0x8] sm:$0xff]
      %s900 = scalar_lea.vmem %s2, 16
      %v901 = vld [vmem:[%s900] sm:$0xff]
      %v902 = vld [vmem:[%s900 + $0x8] sm:$0xff]
      %904 = vset.pattern.permute.xlu0 0
      %905 = vperm.xlu0 %904, %v901
      %v906 = vpop.permute.xlu0 %905
      %909 = vset.pattern.permute.xlu0 0
      %910 = vperm.xlu0 %909, %v902
      %v911 = vpop.permute.xlu0 %910
      %v914 = vsel %vm447, %v898, 0
      %v917 = vsel %vm447, %v899, 0
      %919 = vmatprep.subr.mxu0 %v840
      %920 = vmatpush1.msra.mxu0 %v839
      %921 = vmatprep.subr.mxu0 %v848
      %922 = vmatpush1.msra.mxu0 %v847
      %923 = vmatprep.subr.mxu0 %v856
      %924 = vmatpush1.msra.mxu0 %v855
      %925 = vmatprep.subr.mxu0 %v864
      %926 = vmatpush1.msra.mxu0 %v863
      %927 = vmatprep.subr.mxu0 %v832
      %928 = vmatpush1.msra.mxu0 %v831
      %929 = vmatprep.subr.mxu0 %v872
      %930 = vmatpush1.msra.mxu0 %v871
      %931 = vmatprep.subr.mxu0 %v880
      %932 = vmatpush1.msra.mxu0 %v879
      %933 = vmatprep.subr.mxu0 %v888
      %934 = vmatpush1.msra.mxu0 %v887
      %935 = vmatprep.subr.mxu0 %v896
      %936 = vmatpush1.msra.mxu0 %v895
      %937 = vmatprep.subr.mxu0 0.0
      %938 = vmatpush1.msra.mxu0 0.0
      %939 = vmatprep.subr.mxu0 0.0
      %940 = vmatpush1.msra.mxu0 0.0
      %941 = vmatprep.subr.mxu0 0.0
      %942 = vmatpush1.msra.mxu0 0.0
      %943 = vmatprep.subr.mxu0 0.0
      %944 = vmatpush1.msra.mxu0 0.0
      %945 = vmatprep.subr.mxu0 0.0
      %946 = vmatpush1.msra.mxu0 0.0
      %947 = vmatprep.subr.mxu0 0.0
      %948 = vmatpush1.msra.mxu0 0.0
      %949 = vmatprep.subr.mxu0 0.0
      %950 = vmatpush1.msra.mxu0 0.0
      %951 = vmatprep.subr.mxu0 0.0
      %952 = vmatpush1.msra.mxu0 0.0
      %953 = vmatprep.subr.mxu0 0.0
      %954 = vmatpush1.msra.mxu0 0.0
      %955 = vmatprep.subr.mxu0 0.0
      %956 = vmatpush1.msra.mxu0 0.0
      %957 = vmatprep.subr.mxu0 0.0
      %958 = vmatpush1.msra.mxu0 0.0
      %959 = vmatprep.subr.mxu0 0.0
      %960 = vmatpush1.msra.mxu0 0.0
      %961 = vmatprep.subr.mxu0 0.0
      %962 = vmatpush1.msra.mxu0 0.0
      %963 = vmatprep.subr.mxu0 0.0
      %964 = vmatpush1.msra.mxu0 0.0
      %965 = vmatprep.subr.mxu0 0.0
      %966 = vmatpush1.msra.mxu0 0.0
      %967 = vmatprep.subr.mxu0 0.0
      %968 = vmatpush1.msra.mxu0 0.0
      %969 = vmatprep.subr.mxu0 0.0
      %970 = vmatpush1.msra.mxu0 0.0
      %971 = vmatprep.subr.mxu0 0.0
      %972 = vmatpush1.msra.mxu0 0.0
      %973 = vmatprep.subr.mxu0 0.0
      %974 = vmatpush1.msra.mxu0 0.0
      %975 = vmatprep.subr.mxu0 0.0
      %976 = vmatpush1.msra.mxu0 0.0
      %977 = vmatprep.subr.mxu0 0.0
      %978 = vmatpush1.msra.mxu0 0.0
      %979 = vmatprep.subr.mxu0 0.0
      %980 = vmatpush1.msra.mxu0 0.0
      %981 = vmatprep.subr.mxu0 0.0
      %982 = vmatpush1.msra.mxu0 0.0
      %983 = vmatprep.mubr.f32.mxu0 0.0
      %984 = vmatmul.mubr.f32.gmra.mrb[0].mxu0 %v914
      %v985 = vpop.f32.mrb[0].mxu0
      %v986 = vadd.f32 %v906, %v985
      %v987 = vpop.f32.mrb[0].mxu0
      %v988 = vadd.f32 %v906, %v987
      %989 = vmatprep.mubr.f32.mxu0 0.0
      %990 = vmatmul.mubr.f32.gmra.mrb[0].mxu0 %v917
      %v991 = vpop.f32.mrb[0].mxu0
      %v992 = vadd.f32 %v911, %v991
      %v993 = vpop.f32.mrb[0].mxu0
      %v994 = vadd.f32 %v911, %v993
      %995 = vdwg.mxu0
      %v996 = vmax.f32 %v986, 0.0
      %v997 = vmax.f32 %v988, 0.0
      %998 = vrot.lane.b32.xlu0 %v996, 17
      %v999 = vpop.permute.xlu0 %998
      %1000 = vrot.lane.b32.xlu0 %v997, 17
      %v1001 = vpop.permute.xlu0 %1000
      %v1002 = vsel %vm277, %v999, %v1001
      %v1003 = vsel %vm277, %v1001, %v999
      %v1004 = vmul.f32 %v1003, %v284
      %v1005 = vmul.f32 %v1002, %v288
      %1006 = vrot.lane.b32.xlu0 %v996, 16
      %v1007 = vpop.permute.xlu0 %1006
      %1008 = vrot.lane.b32.xlu0 %v997, 16
      %v1009 = vpop.permute.xlu0 %1008
      %v1010 = vsel %vm297, %v1007, %v1009
      %v1011 = vsel %vm297, %v1009, %v1007
      %v1012 = vmul.f32 %v1011, %v304
      %v1013 = vmul.f32 %v1010, %v308
      %1014 = vrot.lane.b32.xlu0 %v996, 15
      %v1015 = vpop.permute.xlu0 %1014
      %1016 = vrot.lane.b32.xlu0 %v997, 15
      %v1017 = vpop.permute.xlu0 %1016
      %v1018 = vsel %vm317, %v1015, %v1017
      %v1019 = vsel %vm317, %v1017, %v1015
      %v1020 = vmul.f32 %v1019, %v324
      %v1021 = vmul.f32 %v1018, %v328
      %1022 = vrot.lane.b32.xlu0 %v996, 1
      %v1023 = vpop.permute.xlu0 %1022
      %1024 = vrot.lane.b32.xlu0 %v997, 1
      %v1025 = vpop.permute.xlu0 %1024
      %v1026 = vsel %vm337, %v1023, %v1025
      %v1027 = vsel %vm337, %v1025, %v1023
      %v1028 = vmul.f32 %v1027, %v344
      %v1029 = vmul.f32 %v1026, %v348
      %1030 = vrot.lane.b32.xlu0 %v996, 127
      %v1031 = vpop.permute.xlu0 %1030
      %1032 = vrot.lane.b32.xlu0 %v997, 127
      %v1033 = vpop.permute.xlu0 %1032
      %v1034 = vsel %vm357, %v1031, %v1033
      %v1035 = vsel %vm357, %v1033, %v1031
      %v1036 = vmul.f32 %v1034, %v364
      %v1037 = vmul.f32 %v1035, %v368
      %1038 = vrot.lane.b32.xlu0 %v996, 113
      %v1039 = vpop.permute.xlu0 %1038
      %1040 = vrot.lane.b32.xlu0 %v997, 113
      %v1041 = vpop.permute.xlu0 %1040
      %v1042 = vsel %vm377, %v1039, %v1041
      %v1043 = vsel %vm377, %v1041, %v1039
      %v1044 = vmul.f32 %v1042, %v384
      %v1045 = vmul.f32 %v1043, %v388
      %1046 = vrot.lane.b32.xlu0 %v996, 112
      %v1047 = vpop.permute.xlu0 %1046
      %1048 = vrot.lane.b32.xlu0 %v997, 112
      %v1049 = vpop.permute.xlu0 %1048
      %v1050 = vsel %vm397, %v1047, %v1049
      %v1051 = vsel %vm397, %v1049, %v1047
      %v1052 = vmul.f32 %v1050, %v404
      %v1053 = vmul.f32 %v1051, %v408
      %1054 = vrot.lane.b32.xlu0 %v996, 111
      %v1055 = vpop.permute.xlu0 %1054
      %1056 = vrot.lane.b32.xlu0 %v997, 111
      %v1057 = vpop.permute.xlu0 %1056
      %v1058 = vsel %vm417, %v1055, %v1057
      %v1059 = vsel %vm417, %v1057, %v1055
      %v1060 = vmul.f32 %v1058, %v424
      %v1061 = vmul.f32 %v1059, %v428
      %s1062 = scalar_lea.vmem %s3, 16
      %v1063 = vld [vmem:[%s1062] sm:$0xff]
      %s1064 = scalar_lea.vmem %s4, 16
      %v1065 = vld [vmem:[%s1064] sm:$0xff]
      %1067 = vset.pattern.permute.xlu0 0
      %1068 = vperm.xlu0 %1067, %v1065
      %v1069 = vpop.permute.xlu0 %1068
      %v1072 = vsel %vm447, %v1063, 0
      %1074 = vmatprep.subr.mxu0 %v1005
      %1075 = vmatpush1.msra.mxu0 %v1004
      %1076 = vmatprep.subr.mxu0 %v1013
      %1077 = vmatpush1.msra.mxu0 %v1012
      %1078 = vmatprep.subr.mxu0 %v1021
      %1079 = vmatpush1.msra.mxu0 %v1020
      %1080 = vmatprep.subr.mxu0 %v1029
      %1081 = vmatpush1.msra.mxu0 %v1028
      %1082 = vmatprep.subr.mxu0 %v997
      %1083 = vmatpush1.msra.mxu0 %v996
      %1084 = vmatprep.subr.mxu0 %v1037
      %1085 = vmatpush1.msra.mxu0 %v1036
      %1086 = vmatprep.subr.mxu0 %v1045
      %1087 = vmatpush1.msra.mxu0 %v1044
      %1088 = vmatprep.subr.mxu0 %v1053
      %1089 = vmatpush1.msra.mxu0 %v1052
      %1090 = vmatprep.subr.mxu0 %v1061
      %1091 = vmatpush1.msra.mxu0 %v1060
      %1092 = vmatprep.subr.mxu0 0.0
      %1093 = vmatpush1.msra.mxu0 0.0
      %1094 = vmatprep.subr.mxu0 0.0
      %1095 = vmatpush1.msra.mxu0 0.0
      %1096 = vmatprep.subr.mxu0 0.0
      %1097 = vmatpush1.msra.mxu0 0.0
      %1098 = vmatprep.subr.mxu0 0.0
      %1099 = vmatpush1.msra.mxu0 0.0
      %1100 = vmatprep.subr.mxu0 0.0
      %1101 = vmatpush1.msra.mxu0 0.0
      %1102 = vmatprep.subr.mxu0 0.0
      %1103 = vmatpush1.msra.mxu0 0.0
      %1104 = vmatprep.subr.mxu0 0.0
      %1105 = vmatpush1.msra.mxu0 0.0
      %1106 = vmatprep.subr.mxu0 0.0
      %1107 = vmatpush1.msra.mxu0 0.0
      %1108 = vmatprep.subr.mxu0 0.0
      %1109 = vmatpush1.msra.mxu0 0.0
      %1110 = vmatprep.subr.mxu0 0.0
      %1111 = vmatpush1.msra.mxu0 0.0
      %1112 = vmatprep.subr.mxu0 0.0
      %1113 = vmatpush1.msra.mxu0 0.0
      %1114 = vmatprep.subr.mxu0 0.0
      %1115 = vmatpush1.msra.mxu0 0.0
      %1116 = vmatprep.subr.mxu0 0.0
      %1117 = vmatpush1.msra.mxu0 0.0
      %1118 = vmatprep.subr.mxu0 0.0
      %1119 = vmatpush1.msra.mxu0 0.0
      %1120 = vmatprep.subr.mxu0 0.0
      %1121 = vmatpush1.msra.mxu0 0.0
      %1122 = vmatprep.subr.mxu0 0.0
      %1123 = vmatpush1.msra.mxu0 0.0
      %1124 = vmatprep.subr.mxu0 0.0
      %1125 = vmatpush1.msra.mxu0 0.0
      %1126 = vmatprep.subr.mxu0 0.0
      %1127 = vmatpush1.msra.mxu0 0.0
      %1128 = vmatprep.subr.mxu0 0.0
      %1129 = vmatpush1.msra.mxu0 0.0
      %1130 = vmatprep.subr.mxu0 0.0
      %1131 = vmatpush1.msra.mxu0 0.0
      %1132 = vmatprep.subr.mxu0 0.0
      %1133 = vmatpush1.msra.mxu0 0.0
      %1134 = vmatprep.subr.mxu0 0.0
      %1135 = vmatpush1.msra.mxu0 0.0
      %1136 = vmatprep.subr.mxu0 0.0
      %1137 = vmatpush1.msra.mxu0 0.0
      %1138 = vmatprep.mubr.f32.mxu0 0.0
      %1139 = vmatmul.mubr.f32.gmra.mrb[0].mxu0 %v1072
      %v1140 = vpop.f32.mrb[0].mxu0
      %v1141 = vadd.f32 %v1069, %v1140
      %v1142 = vpop.f32.mrb[0].mxu0
      %v1143 = vadd.f32 %v1069, %v1142
      %1144 = vdwg.mxu0
      %v1145 = vmax.f32 %v992, 0.0
      %v1146 = vmax.f32 %v994, 0.0
      %1147 = vrot.lane.b32.xlu0 %v1145, 17
      %v1148 = vpop.permute.xlu0 %1147
      %1149 = vrot.lane.b32.xlu0 %v1146, 17
      %v1150 = vpop.permute.xlu0 %1149
      %v1151 = vsel %vm277, %v1148, %v1150
      %v1152 = vsel %vm277, %v1150, %v1148
      %v1153 = vmul.f32 %v1152, %v284
      %v1154 = vmul.f32 %v1151, %v288
      %1155 = vrot.lane.b32.xlu0 %v1145, 16
      %v1156 = vpop.permute.xlu0 %1155
      %1157 = vrot.lane.b32.xlu0 %v1146, 16
      %v1158 = vpop.permute.xlu0 %1157
      %v1159 = vsel %vm297, %v1156, %v1158
      %v1160 = vsel %vm297, %v1158, %v1156
      %v1161 = vmul.f32 %v1160, %v304
      %v1162 = vmul.f32 %v1159, %v308
      %1163 = vrot.lane.b32.xlu0 %v1145, 15
      %v1164 = vpop.permute.xlu0 %1163
      %1165 = vrot.lane.b32.xlu0 %v1146, 15
      %v1166 = vpop.permute.xlu0 %1165
      %v1167 = vsel %vm317, %v1164, %v1166
      %v1168 = vsel %vm317, %v1166, %v1164
      %v1169 = vmul.f32 %v1168, %v324
      %v1170 = vmul.f32 %v1167, %v328
      %1171 = vrot.lane.b32.xlu0 %v1145, 1
      %v1172 = vpop.permute.xlu0 %1171
      %1173 = vrot.lane.b32.xlu0 %v1146, 1
      %v1174 = vpop.permute.xlu0 %1173
      %v1175 = vsel %vm337, %v1172, %v1174
      %v1176 = vsel %vm337, %v1174, %v1172
      %v1177 = vmul.f32 %v1176, %v344
      %v1178 = vmul.f32 %v1175, %v348
      %1179 = vrot.lane.b32.xlu0 %v1145, 127
      %v1180 = vpop.permute.xlu0 %1179
      %1181 = vrot.lane.b32.xlu0 %v1146, 127
      %v1182 = vpop.permute.xlu0 %1181
      %v1183 = vsel %vm357, %v1180, %v1182
      %v1184 = vsel %vm357, %v1182, %v1180
      %v1185 = vmul.f32 %v1183, %v364
      %v1186 = vmul.f32 %v1184, %v368
      %1187 = vrot.lane.b32.xlu0 %v1145, 113
      %v1188 = vpop.permute.xlu0 %1187
      %1189 = vrot.lane.b32.xlu0 %v1146, 113
      %v1190 = vpop.permute.xlu0 %1189
      %v1191 = vsel %vm377, %v1188, %v1190
      %v1192 = vsel %vm377, %v1190, %v1188
      %v1193 = vmul.f32 %v1191, %v384
      %v1194 = vmul.f32 %v1192, %v388
      %1195 = vrot.lane.b32.xlu0 %v1145, 112
      %v1196 = vpop.permute.xlu0 %1195
      %1197 = vrot.lane.b32.xlu0 %v1146, 112
      %v1198 = vpop.permute.xlu0 %1197
      %v1199 = vsel %vm397, %v1196, %v1198
      %v1200 = vsel %vm397, %v1198, %v1196
      %v1201 = vmul.f32 %v1199, %v404
      %v1202 = vmul.f32 %v1200, %v408
      %1203 = vrot.lane.b32.xlu0 %v1145, 111
      %v1204 = vpop.permute.xlu0 %1203
      %1205 = vrot.lane.b32.xlu0 %v1146, 111
      %v1206 = vpop.permute.xlu0 %1205
      %v1207 = vsel %vm417, %v1204, %v1206
      %v1208 = vsel %vm417, %v1206, %v1204
      %v1209 = vmul.f32 %v1207, %v424
      %v1210 = vmul.f32 %v1208, %v428
      %s1211 = scalar_lea.vmem %s3, 24
      %v1212 = vld [vmem:[%s1211] sm:$0xff]
      %s1213 = scalar_lea.vmem %s4, 24
      %v1214 = vld [vmem:[%s1213] sm:$0xff]
      %1216 = vset.pattern.permute.xlu0 0
      %1217 = vperm.xlu0 %1216, %v1214
      %v1218 = vpop.permute.xlu0 %1217
      %v1221 = vsel %vm447, %v1212, 0
      %1223 = vmatprep.subr.mxu0 %v1154
      %1224 = vmatpush1.msra.mxu0 %v1153
      %1225 = vmatprep.subr.mxu0 %v1162
      %1226 = vmatpush1.msra.mxu0 %v1161
      %1227 = vmatprep.subr.mxu0 %v1170
      %1228 = vmatpush1.msra.mxu0 %v1169
      %1229 = vmatprep.subr.mxu0 %v1178
      %1230 = vmatpush1.msra.mxu0 %v1177
      %1231 = vmatprep.subr.mxu0 %v1146
      %1232 = vmatpush1.msra.mxu0 %v1145
      %1233 = vmatprep.subr.mxu0 %v1186
      %1234 = vmatpush1.msra.mxu0 %v1185
      %1235 = vmatprep.subr.mxu0 %v1194
      %1236 = vmatpush1.msra.mxu0 %v1193
      %1237 = vmatprep.subr.mxu0 %v1202
      %1238 = vmatpush1.msra.mxu0 %v1201
      %1239 = vmatprep.subr.mxu0 %v1210
      %1240 = vmatpush1.msra.mxu0 %v1209
      %1241 = vmatprep.subr.mxu0 0.0
      %1242 = vmatpush1.msra.mxu0 0.0
      %1243 = vmatprep.subr.mxu0 0.0
      %1244 = vmatpush1.msra.mxu0 0.0
      %1245 = vmatprep.subr.mxu0 0.0
      %1246 = vmatpush1.msra.mxu0 0.0
      %1247 = vmatprep.subr.mxu0 0.0
      %1248 = vmatpush1.msra.mxu0 0.0
      %1249 = vmatprep.subr.mxu0 0.0
      %1250 = vmatpush1.msra.mxu0 0.0
      %1251 = vmatprep.subr.mxu0 0.0
      %1252 = vmatpush1.msra.mxu0 0.0
      %1253 = vmatprep.subr.mxu0 0.0
      %1254 = vmatpush1.msra.mxu0 0.0
      %1255 = vmatprep.subr.mxu0 0.0
      %1256 = vmatpush1.msra.mxu0 0.0
      %1257 = vmatprep.subr.mxu0 0.0
      %1258 = vmatpush1.msra.mxu0 0.0
      %1259 = vmatprep.subr.mxu0 0.0
      %1260 = vmatpush1.msra.mxu0 0.0
      %1261 = vmatprep.subr.mxu0 0.0
      %1262 = vmatpush1.msra.mxu0 0.0
      %1263 = vmatprep.subr.mxu0 0.0
      %1264 = vmatpush1.msra.mxu0 0.0
      %1265 = vmatprep.subr.mxu0 0.0
      %1266 = vmatpush1.msra.mxu0 0.0
      %1267 = vmatprep.subr.mxu0 0.0
      %1268 = vmatpush1.msra.mxu0 0.0
      %1269 = vmatprep.subr.mxu0 0.0
      %1270 = vmatpush1.msra.mxu0 0.0
      %1271 = vmatprep.subr.mxu0 0.0
      %1272 = vmatpush1.msra.mxu0 0.0
      %1273 = vmatprep.subr.mxu0 0.0
      %1274 = vmatpush1.msra.mxu0 0.0
      %1275 = vmatprep.subr.mxu0 0.0
      %1276 = vmatpush1.msra.mxu0 0.0
      %1277 = vmatprep.subr.mxu0 0.0
      %1278 = vmatpush1.msra.mxu0 0.0
      %1279 = vmatprep.subr.mxu0 0.0
      %1280 = vmatpush1.msra.mxu0 0.0
      %1281 = vmatprep.subr.mxu0 0.0
      %1282 = vmatpush1.msra.mxu0 0.0
      %1283 = vmatprep.subr.mxu0 0.0
      %1284 = vmatpush1.msra.mxu0 0.0
      %1285 = vmatprep.subr.mxu0 0.0
      %1286 = vmatpush1.msra.mxu0 0.0
      %1287 = vmatprep.mubr.f32.mxu0 0.0
      %1288 = vmatmul.mubr.f32.gmra.mrb[0].mxu0 %v1221
      %v1289 = vpop.f32.mrb[0].mxu0
      %v1290 = vadd.f32 %v1218, %v1289
      %v1291 = vpop.f32.mrb[0].mxu0
      %v1292 = vadd.f32 %v1218, %v1291
      %1293 = vdwg.mxu0
      %v1294 = vadd.f32 %v1141, %v1290
      %v1295 = vadd.f32 %v1143, %v1292
      %v1296 = vadd.f32 %v1294, %v829
      %v1297 = vadd.f32 %v1295, %v830
      %1298 = vst [vmem:[%s251] sm:$0xff] %v1296
      %1299 = vst [vmem:[%s251 + $0x8] sm:$0xff] %v1297
      %p1300 = scmp.lt.s32.totalorder %s17, 1
      %s1301 = scalar_select %p1300, %s17, 1
      %s1302 = smul.addr %s1301, 2
      %s1303 = smul.addr %s1302, 8
      %s1304 = scalar_lea.vmem %s6, %s1303
      // Predicated region
      $region45: #{residual_group_forward.1} parent=43 // pred_check
        %p1305 = pneg %p166
      $region46: #{residual_group_forward.1} parent=43 // pred_check_branch
        %1307 = sbr.rel (%p1305) target = $region48
      $region47: #{residual_group_forward.1} parent=43 // pred_region
        _
      $region48: #{residual_group_forward.1} parent=43 // pred_fallthru
        _
    $region44: #{residual_group_forward.1} parent=5 // pred_fallthru
      _
    %p1308 = scmp.le.s32.totalorder 2, %s12
    // Predicated region
    $region49: #{residual_group_forward.1} parent=5 // pred_check
      %p1309 = pneg %p1308
    $region50: #{residual_group_forward.1} parent=5 // pred_check_branch
      %1311 = sbr.rel (%p1309) target = $region52
    $region51: #{residual_group_forward.1} parent=5 // pred_region
      %s1312 = ssub.s32 %s12, 2
      // Predicated region
      $region53: #{residual_group_forward.1} parent=51 // pred_check
        %p1313 = pneg %p172
      $region54: #{residual_group_forward.1} parent=51 // pred_check_branch
        %1315 = sbr.rel (%p1313) target = $region56
      $region55: #{residual_group_forward.1} parent=51 // pred_region
        %p1316 = scmp.lt.s32.totalorder %s18, 1
        %s1317 = scalar_select %p1316, %s18, 1
        %s1318 = smul.addr %s1317, 2
        %s1319 = smul.addr %s1318, 8
        %s1320 = scalar_lea.vmem %s6, %s1319
      $region56: #{residual_group_forward.1} parent=51 // pred_fallthru
        _
    $region52: #{residual_group_forward.1} parent=5 // pred_fallthru
      _
  $region6: #{residual_group_forward.1} parent=0 // loop_footer
    %s16 = sadd.s32 1, %s12
  $region7: #{residual_group_forward.1} parent=0 // loop_footer_branch
    %11 = sbr.rel target = $region3
  $region8: #{residual_group_forward.1} parent=0 // loop_exit
    _

</llo_original>
